<compile_context>
chip_gen: v6e
topology: v6e:2x2x1
jax: 0.10.0
libtpu: 0.0.40
codegen_flags: <defaults>
</compile_context>

<pallas_src>
import math

import jax
import jax.numpy as jnp
from jax import lax
from jax.experimental import pallas as pl
from jax.experimental.pallas import tpu as pltpu

KS = 3            # depthwise conv kernel size
PAD = KS // 2     # 'same' padding


def dwconv_kernel(x_ref, w_ref, b_ref, o_ref):
    # x_ref : (BB, H, W, CC)   input tile (NHWC), input dtype
    # w_ref : (9, CC)          per-tap, per-channel weights (f32)
    # b_ref : (1, CC)          bias (f32)
    # o_ref : (BB, H, W, CC)   output tile, input dtype
    BB, H, W, CC = x_ref.shape
    f32 = jnp.float32

    wt = w_ref[...]                                    # (9, CC)
    b_plane = b_ref[...].reshape(1, 1, 1, CC)          # (1, 1, 1, CC)

    # Column masks for the +/-1 W shifts, folded into the tap weights once
    # (hoisted out of the row loop) so the wrapped column of each roll is
    # zeroed by the same multiply that applies the tap weight.
    col = lax.broadcasted_iota(jnp.int32, (1, 1, W, CC), 2)
    m_left = (col >= 1).astype(f32)                    # tap reads x[w-1]
    m_right = (col <= W - 2).astype(f32)               # tap reads x[w+1]

    def tap_weight(kh, kw):
        v = wt[kh * KS + kw, :].reshape(1, 1, 1, CC)
        if kw == 0:
            return m_left * v
        if kw == 2:
            return m_right * v
        return v

    wp = [[tap_weight(kh, kw) for kw in range(KS)] for kh in range(KS)]

    def load_row(r):
        # H is a leading (untiled) dim of the VMEM block: dynamic slicing here
        # is just an address offset, no sublane/lane realignment.
        return x_ref[:, pl.ds(r, 1), :, :].astype(f32)     # (BB, 1, W, CC)

    def row_terms(row, kh):
        # x[w-1] / x[w+1] via XLU rolls (roll by W-1 == roll by -1); the
        # wrapped columns are zeroed by the pre-masked tap weights.
        left = pltpu.roll(row, shift=1, axis=2)
        right = pltpu.roll(row, shift=W - 1, axis=2)
        return left * wp[kh][0] + row * wp[kh][1] + right * wp[kh][2]

    def store_row(h, acc):
        o_ref[:, pl.ds(h, 1), :, :] = (acc + b_plane).astype(o_ref.dtype)

    if H == 1:
        store_row(0, row_terms(load_row(0), 1))
        return

    # Interior rows: all three input rows exist -> no H-edge handling at all.
    def interior(h, carry):
        acc = row_terms(load_row(h - 1), 0)
        acc = acc + row_terms(load_row(h), 1)
        acc = acc + row_terms(load_row(h + 1), 2)
        store_row(h, acc)
        return carry

    if H > 2:
        lax.fori_loop(1, H - 1, interior, 0, unroll=(H <= 64))

    # Top / bottom rows: the out-of-range tap row is dropped statically.
    store_row(0, row_terms(load_row(0), 1) + row_terms(load_row(1), 2))
    store_row(H - 1,
              row_terms(load_row(H - 2), 0) + row_terms(load_row(H - 1), 1))


def _vmem_budget():
    """Generation-aware per-step working-set budget and VMEM limit."""
    cap = 64 * 1024 * 1024                  # conservative default (v7x per-core)
    try:
        cap = int(pltpu.get_tpu_info().vmem_capacity_bytes)
    except Exception:
        pass
    step_budget = max(cap // 8, 4 * 1024 * 1024)       # ~16 MiB v5e/v6e, ~8 MiB v7x
    vmem_limit = min(cap * 3 // 4, 100 * 1024 * 1024)  # ~96 MiB v5e/v6e, ~48 MiB v7x
    return step_budget, vmem_limit


def _pick_blocks(B, C, H, W, itemsize, step_budget):
    """Choose (batch block BB, channel block CC)."""
    # Channel block: lane-dense (multiple-of-128) slices for big C so per-row
    # temporaries stay within the vreg file; otherwise keep the full C.
    CC = C
    if C > 256 and C % 128 == 0:
        CC = 256 if C % 256 == 0 else 128

    def fits(bb, cc):
        tile = bb * H * W * cc * itemsize
        # in + out, double-buffered, plus slack for weights / in-kernel temps.
        return 4 * tile + (2 << 20) <= step_budget

    BB = 1
    for cand in range(B, 0, -1):
        if B % cand == 0 and fits(cand, CC):
            BB = cand
            break

    if not fits(BB, CC) and CC == 256:
        CC = 128
    # TODO(synk): if a single-image, 128-channel tile still exceeds the budget
    # (very large H*W), add an H-tiled grid axis with a manual 1-row-halo DMA.

    # Keep >= 2 grid steps when possible so both v7x TensorCores get work.
    if (B // BB) * (C // CC) < 2:
        if BB % 2 == 0:
            BB //= 2
        elif CC % 256 == 0:
            CC //= 2
    return BB, CC


def dwconv(x, weight, bias, H, W):
    """x: (B, N, C) with N == H*W; weight: (C, 1, 3, 3) OIHW depthwise; bias: (C,)."""
    B, N, C = x.shape
    assert N == H * W, "sequence length must equal H*W"
    assert weight.shape == (C, 1, KS, KS), "expected depthwise OIHW weights"
    assert bias.shape == (C,)

    # (B, N, C) -> (B, H, W, C): free reshape, channels stay on the lane axis.
    # TODO(synk): when C is not a multiple of 128, lane utilization of the
    # (W, C) minor tile is only C/128; folding a factor of W into the lane axis
    # would make it dense but complicates the W-shift taps.
    x_nhwc = x.reshape(B, H, W, C)
    # (C, 1, 3, 3) -> (9, C): one per-channel lane vector per tap.
    w9 = jnp.transpose(weight.reshape(C, KS * KS), (1, 0)).astype(jnp.float32)
    b2 = bias.reshape(1, C).astype(jnp.float32)

    step_budget, vmem_limit = _vmem_budget()
    BB, CC = _pick_blocks(B, C, H, W, x.dtype.itemsize, step_budget)
    grid = (B // BB, C // CC)

    out = pl.pallas_call(
        dwconv_kernel,
        out_shape=jax.ShapeDtypeStruct((B, H, W, C), x.dtype),
        grid=grid,
        in_specs=[
            pl.BlockSpec((BB, H, W, CC), lambda b, c: (b, 0, 0, c)),
            pl.BlockSpec((KS * KS, CC), lambda b, c: (0, c)),
            pl.BlockSpec((1, CC), lambda b, c: (0, c)),
        ],
        out_specs=pl.BlockSpec((BB, H, W, CC), lambda b, c: (b, 0, 0, c)),
        compiler_params=pltpu.CompilerParams(
            dimension_semantics=("parallel", "parallel"),
            vmem_limit_bytes=vmem_limit),
    )(x_nhwc, w9, b2)

    # (B, H, W, C) -> (B, N, C): free reshape == flatten(2).transpose(1, 2).
    return out.reshape(B, N, C)


def dwconv_ref(x, weight, bias, H, W):
    """Pure-JAX reference mirroring the PyTorch forward."""
    B, N, C = x.shape
    x_nchw = jnp.transpose(x, (0, 2, 1)).reshape(B, C, H, W)
    y = lax.conv_general_dilated(
        x_nchw, weight,
        window_strides=(1, 1), padding=((PAD, PAD), (PAD, PAD)),
        dimension_numbers=("NCHW", "OIHW", "NCHW"),
        feature_group_count=C)
    y = y + bias.reshape(1, C, 1, 1)
    return jnp.transpose(y.reshape(B, C, N), (0, 2, 1))


if __name__ == "__main__":
    key = jax.random.PRNGKey(0)
    kx, kw, kb = jax.random.split(key, 3)

    B, C, H, W = 2, 32, 16, 16
    N = H * W
    x = jax.random.normal(kx, (B, N, C), dtype=jnp.float32)

    # Conv2d(C, C, 3, groups=C, bias=True)-style init (PyTorch uniform bound).
    fan_in = 1 * KS * KS
    bound = 1.0 / math.sqrt(fan_in)
    weight = jax.random.uniform(
        kw, (C, 1, KS, KS), minval=-bound, maxval=bound, dtype=jnp.float32)
    bias = jax.random.uniform(
        kb, (C,), minval=-bound, maxval=bound, dtype=jnp.float32)

    out = jax.block_until_ready(dwconv(x, weight, bias, H, W))
    ref = dwconv_ref(x, weight, bias, H, W)

    assert out.shape == (B, N, C)
    assert jnp.allclose(out, ref, atol=1e-5, rtol=1e-5), "mismatch vs reference"
    print("KERNEL_OK")
</pallas_src>

<mosaic_0001>
module attributes {stable_mosaic.version = 11 : i64} {
  func.func @dwconv_kernel(%arg0: i32, %arg1: i32, %arg2: memref<1x16x16x32xf32, #tpu.memory_space<vmem>>, %arg3: memref<9x32xf32, #tpu.memory_space<vmem>>, %arg4: memref<1x32xf32, #tpu.memory_space<vmem>>, %arg5: memref<1x16x16x32xf32, #tpu.memory_space<vmem>>) attributes {dimension_semantics = [#tpu.dimension_semantics<parallel>, #tpu.dimension_semantics<parallel>], iteration_bounds = array<i64: 2, 1>, scalar_prefetch = 0 : i64, scratch_operands = 0 : i64, tpu.core_type = #tpu.core_type<tc>, window_params = [{transform_indices = @transform_0, window_bounds = array<i64: 1, 16, 16, 32>}, {transform_indices = @transform_1, window_bounds = array<i64: 9, 32>}, {transform_indices = @transform_2, window_bounds = array<i64: 1, 32>}, {transform_indices = @transform_3, window_bounds = array<i64: 1, 16, 16, 32>}]} {
    %c0 = arith.constant 0 : index
    %c0_0 = arith.constant 0 : index
    %0 = vector.load %arg3[%c0, %c0_0] : memref<9x32xf32, #tpu.memory_space<vmem>>, vector<9x32xf32>
    %c0_1 = arith.constant 0 : index
    %c0_2 = arith.constant 0 : index
    %1 = vector.load %arg4[%c0_1, %c0_2] : memref<1x32xf32, #tpu.memory_space<vmem>>, vector<1x32xf32>
    %2 = vector.shape_cast %1 : vector<1x32xf32> to vector<1x1x1x32xf32>
    %3 = tpu.iota {dimensions = array<i32: 2>} : vector<1x1x16x32xi32>
    %c1_i32 = arith.constant 1 : i32
    %4 = vector.broadcast %c1_i32 : i32 to vector<1x1x16x32xi32>
    %5 = arith.cmpi sge, %3, %4 : vector<1x1x16x32xi32>
    %6 = arith.extui %5 : vector<1x1x16x32xi1> to vector<1x1x16x32xi32>
    %7 = arith.sitofp %6 : vector<1x1x16x32xi32> to vector<1x1x16x32xf32>
    %c14_i32 = arith.constant 14 : i32
    %8 = vector.broadcast %c14_i32 : i32 to vector<1x1x16x32xi32>
    %9 = arith.cmpi sle, %3, %8 : vector<1x1x16x32xi32>
    %10 = arith.extui %9 : vector<1x1x16x32xi1> to vector<1x1x16x32xi32>
    %11 = arith.sitofp %10 : vector<1x1x16x32xi32> to vector<1x1x16x32xf32>
    %12 = vector.extract_strided_slice %0 {offsets = [0, 0], sizes = [1, 32], strides = [1, 1]} : vector<9x32xf32> to vector<1x32xf32>
    %13 = vector.shape_cast %12 : vector<1x32xf32> to vector<32xf32>
    %14 = vector.shape_cast %13 : vector<32xf32> to vector<1x1x1x32xf32>
    %15 = vector.broadcast %14 : vector<1x1x1x32xf32> to vector<1x1x16x32xf32>
    %16 = arith.mulf %7, %15 : vector<1x1x16x32xf32>
    %17 = vector.extract_strided_slice %0 {offsets = [1, 0], sizes = [1, 32], strides = [1, 1]} : vector<9x32xf32> to vector<1x32xf32>
    %18 = vector.shape_cast %17 : vector<1x32xf32> to vector<32xf32>
    %19 = vector.shape_cast %18 : vector<32xf32> to vector<1x1x1x32xf32>
    %20 = vector.extract_strided_slice %0 {offsets = [2, 0], sizes = [1, 32], strides = [1, 1]} : vector<9x32xf32> to vector<1x32xf32>
    %21 = vector.shape_cast %20 : vector<1x32xf32> to vector<32xf32>
    %22 = vector.shape_cast %21 : vector<32xf32> to vector<1x1x1x32xf32>
    %23 = vector.broadcast %22 : vector<1x1x1x32xf32> to vector<1x1x16x32xf32>
    %24 = arith.mulf %11, %23 : vector<1x1x16x32xf32>
    %25 = vector.extract_strided_slice %0 {offsets = [3, 0], sizes = [1, 32], strides = [1, 1]} : vector<9x32xf32> to vector<1x32xf32>
    %26 = vector.shape_cast %25 : vector<1x32xf32> to vector<32xf32>
    %27 = vector.shape_cast %26 : vector<32xf32> to vector<1x1x1x32xf32>
    %28 = vector.broadcast %27 : vector<1x1x1x32xf32> to vector<1x1x16x32xf32>
    %29 = arith.mulf %7, %28 : vector<1x1x16x32xf32>
    %30 = vector.extract_strided_slice %0 {offsets = [4, 0], sizes = [1, 32], strides = [1, 1]} : vector<9x32xf32> to vector<1x32xf32>
    %31 = vector.shape_cast %30 : vector<1x32xf32> to vector<32xf32>
    %32 = vector.shape_cast %31 : vector<32xf32> to vector<1x1x1x32xf32>
    %33 = vector.extract_strided_slice %0 {offsets = [5, 0], sizes = [1, 32], strides = [1, 1]} : vector<9x32xf32> to vector<1x32xf32>
    %34 = vector.shape_cast %33 : vector<1x32xf32> to vector<32xf32>
    %35 = vector.shape_cast %34 : vector<32xf32> to vector<1x1x1x32xf32>
    %36 = vector.broadcast %35 : vector<1x1x1x32xf32> to vector<1x1x16x32xf32>
    %37 = arith.mulf %11, %36 : vector<1x1x16x32xf32>
    %38 = vector.extract_strided_slice %0 {offsets = [6, 0], sizes = [1, 32], strides = [1, 1]} : vector<9x32xf32> to vector<1x32xf32>
    %39 = vector.shape_cast %38 : vector<1x32xf32> to vector<32xf32>
    %40 = vector.shape_cast %39 : vector<32xf32> to vector<1x1x1x32xf32>
    %41 = vector.broadcast %40 : vector<1x1x1x32xf32> to vector<1x1x16x32xf32>
    %42 = arith.mulf %7, %41 : vector<1x1x16x32xf32>
    %43 = vector.extract_strided_slice %0 {offsets = [7, 0], sizes = [1, 32], strides = [1, 1]} : vector<9x32xf32> to vector<1x32xf32>
    %44 = vector.shape_cast %43 : vector<1x32xf32> to vector<32xf32>
    %45 = vector.shape_cast %44 : vector<32xf32> to vector<1x1x1x32xf32>
    %46 = vector.extract_strided_slice %0 {offsets = [8, 0], sizes = [1, 32], strides = [1, 1]} : vector<9x32xf32> to vector<1x32xf32>
    %47 = vector.shape_cast %46 : vector<1x32xf32> to vector<32xf32>
    %48 = vector.shape_cast %47 : vector<32xf32> to vector<1x1x1x32xf32>
    %49 = vector.broadcast %48 : vector<1x1x1x32xf32> to vector<1x1x16x32xf32>
    %50 = arith.mulf %11, %49 : vector<1x1x16x32xf32>
    %c1_i32_3 = arith.constant 1 : i32
    %c1_i32_4 = arith.constant 1 : i32
    %51 = arith.subi %c1_i32_3, %c1_i32_4 : i32
    %c0_5 = arith.constant 0 : index
    %52 = arith.index_cast %51 : i32 to index
    %c0_6 = arith.constant 0 : index
    %c0_7 = arith.constant 0 : index
    %53 = vector.load %arg2[%c0_5, %52, %c0_6, %c0_7] : memref<1x16x16x32xf32, #tpu.memory_space<vmem>>, vector<1x1x16x32xf32>
    %c1_i32_8 = arith.constant 1 : i32
    %54 = tpu.dynamic_rotate %53 by %c1_i32_8 dim 2 : vector<1x1x16x32xf32>, i32 -> vector<1x1x16x32xf32>
    %c15_i32 = arith.constant 15 : i32
    %55 = tpu.dynamic_rotate %53 by %c15_i32 dim 2 : vector<1x1x16x32xf32>, i32 -> vector<1x1x16x32xf32>
    %56 = arith.mulf %54, %16 : vector<1x1x16x32xf32>
    %57 = vector.broadcast %19 : vector<1x1x1x32xf32> to vector<1x1x16x32xf32>
    %58 = arith.mulf %53, %57 : vector<1x1x16x32xf32>
    %59 = arith.addf %56, %58 : vector<1x1x16x32xf32>
    %60 = arith.mulf %55, %24 : vector<1x1x16x32xf32>
    %61 = arith.addf %59, %60 : vector<1x1x16x32xf32>
    %c0_9 = arith.constant 0 : index
    %62 = arith.index_cast %c1_i32_3 : i32 to index
    %c0_10 = arith.constant 0 : index
    %c0_11 = arith.constant 0 : index
    %63 = vector.load %arg2[%c0_9, %62, %c0_10, %c0_11] : memref<1x16x16x32xf32, #tpu.memory_space<vmem>>, vector<1x1x16x32xf32>
    %c1_i32_12 = arith.constant 1 : i32
    %64 = tpu.dynamic_rotate %63 by %c1_i32_12 dim 2 : vector<1x1x16x32xf32>, i32 -> vector<1x1x16x32xf32>
    %c15_i32_13 = arith.constant 15 : i32
    %65 = tpu.dynamic_rotate %63 by %c15_i32_13 dim 2 : vector<1x1x16x32xf32>, i32 -> vector<1x1x16x32xf32>
    %66 = arith.mulf %64, %29 : vector<1x1x16x32xf32>
    %67 = vector.broadcast %32 : vector<1x1x1x32xf32> to vector<1x1x16x32xf32>
    %68 = arith.mulf %63, %67 : vector<1x1x16x32xf32>
    %69 = arith.addf %66, %68 : vector<1x1x16x32xf32>
    %70 = arith.mulf %65, %37 : vector<1x1x16x32xf32>
    %71 = arith.addf %69, %70 : vector<1x1x16x32xf32>
    %72 = arith.addf %61, %71 : vector<1x1x16x32xf32>
    %c1_i32_14 = arith.constant 1 : i32
    %73 = arith.addi %c1_i32_3, %c1_i32_14 : i32
    %c0_15 = arith.constant 0 : index
    %74 = arith.index_cast %73 : i32 to index
    %c0_16 = arith.constant 0 : index
    %c0_17 = arith.constant 0 : index
    %75 = vector.load %arg2[%c0_15, %74, %c0_16, %c0_17] : memref<1x16x16x32xf32, #tpu.memory_space<vmem>>, vector<1x1x16x32xf32>
    %c1_i32_18 = arith.constant 1 : i32
    %76 = tpu.dynamic_rotate %75 by %c1_i32_18 dim 2 : vector<1x1x16x32xf32>, i32 -> vector<1x1x16x32xf32>
    %c15_i32_19 = arith.constant 15 : i32
    %77 = tpu.dynamic_rotate %75 by %c15_i32_19 dim 2 : vector<1x1x16x32xf32>, i32 -> vector<1x1x16x32xf32>
    %78 = arith.mulf %76, %42 : vector<1x1x16x32xf32>
    %79 = vector.broadcast %45 : vector<1x1x1x32xf32> to vector<1x1x16x32xf32>
    %80 = arith.mulf %75, %79 : vector<1x1x16x32xf32>
    %81 = arith.addf %78, %80 : vector<1x1x16x32xf32>
    %82 = arith.mulf %77, %50 : vector<1x1x16x32xf32>
    %83 = arith.addf %81, %82 : vector<1x1x16x32xf32>
    %84 = arith.addf %72, %83 : vector<1x1x16x32xf32>
    %85 = vector.broadcast %2 : vector<1x1x1x32xf32> to vector<1x1x16x32xf32>
    %86 = arith.addf %84, %85 : vector<1x1x16x32xf32>
    %c0_20 = arith.constant 0 : index
    %87 = arith.index_cast %c1_i32_3 : i32 to index
    %c0_21 = arith.constant 0 : index
    %c0_22 = arith.constant 0 : index
    %88 = vector.load %arg5[%c0_20, %87, %c0_21, %c0_22] : memref<1x16x16x32xf32, #tpu.memory_space<vmem>>, vector<1x1x16x32xf32>
    tpu.vector_store %arg5[%c0_20, %87, %c0_21, %c0_22], %86 {strides = array<i32>} : memref<1x16x16x32xf32, #tpu.memory_space<vmem>>, vector<1x1x16x32xf32>,
    %c2_i32 = arith.constant 2 : i32
    %c1_i32_23 = arith.constant 1 : i32
    %89 = arith.subi %c2_i32, %c1_i32_23 : i32
    %c0_24 = arith.constant 0 : index
    %90 = arith.index_cast %89 : i32 to index
    %c0_25 = arith.constant 0 : index
    %c0_26 = arith.constant 0 : index
    %91 = vector.load %arg2[%c0_24, %90, %c0_25, %c0_26] : memref<1x16x16x32xf32, #tpu.memory_space<vmem>>, vector<1x1x16x32xf32>
    %c1_i32_27 = arith.constant 1 : i32
    %92 = tpu.dynamic_rotate %91 by %c1_i32_27 dim 2 : vector<1x1x16x32xf32>, i32 -> vector<1x1x16x32xf32>
    %c15_i32_28 = arith.constant 15 : i32
    %93 = tpu.dynamic_rotate %91 by %c15_i32_28 dim 2 : vector<1x1x16x32xf32>, i32 -> vector<1x1x16x32xf32>
    %94 = arith.mulf %92, %16 : vector<1x1x16x32xf32>
    %95 = vector.broadcast %19 : vector<1x1x1x32xf32> to vector<1x1x16x32xf32>
    %96 = arith.mulf %91, %95 : vector<1x1x16x32xf32>
    %97 = arith.addf %94, %96 : vector<1x1x16x32xf32>
    %98 = arith.mulf %93, %24 : vector<1x1x16x32xf32>
    %99 = arith.addf %97, %98 : vector<1x1x16x32xf32>
    %c0_29 = arith.constant 0 : index
    %100 = arith.index_cast %c2_i32 : i32 to index
    %c0_30 = arith.constant 0 : index
    %c0_31 = arith.constant 0 : index
    %101 = vector.load %arg2[%c0_29, %100, %c0_30, %c0_31] : memref<1x16x16x32xf32, #tpu.memory_space<vmem>>, vector<1x1x16x32xf32>
    %c1_i32_32 = arith.constant 1 : i32
    %102 = tpu.dynamic_rotate %101 by %c1_i32_32 dim 2 : vector<1x1x16x32xf32>, i32 -> vector<1x1x16x32xf32>
    %c15_i32_33 = arith.constant 15 : i32
    %103 = tpu.dynamic_rotate %101 by %c15_i32_33 dim 2 : vector<1x1x16x32xf32>, i32 -> vector<1x1x16x32xf32>
    %104 = arith.mulf %102, %29 : vector<1x1x16x32xf32>
    %105 = vector.broadcast %32 : vector<1x1x1x32xf32> to vector<1x1x16x32xf32>
    %106 = arith.mulf %101, %105 : vector<1x1x16x32xf32>
    %107 = arith.addf %104, %106 : vector<1x1x16x32xf32>
    %108 = arith.mulf %103, %37 : vector<1x1x16x32xf32>
    %109 = arith.addf %107, %108 : vector<1x1x16x32xf32>
    %110 = arith.addf %99, %109 : vector<1x1x16x32xf32>
    %c1_i32_34 = arith.constant 1 : i32
    %111 = arith.addi %c2_i32, %c1_i32_34 : i32
    %c0_35 = arith.constant 0 : index
    %112 = arith.index_cast %111 : i32 to index
    %c0_36 = arith.constant 0 : index
    %c0_37 = arith.constant 0 : index
    %113 = vector.load %arg2[%c0_35, %112, %c0_36, %c0_37] : memref<1x16x16x32xf32, #tpu.memory_space<vmem>>, vector<1x1x16x32xf32>
    %c1_i32_38 = arith.constant 1 : i32
    %114 = tpu.dynamic_rotate %113 by %c1_i32_38 dim 2 : vector<1x1x16x32xf32>, i32 -> vector<1x1x16x32xf32>
    %c15_i32_39 = arith.constant 15 : i32
    %115 = tpu.dynamic_rotate %113 by %c15_i32_39 dim 2 : vector<1x1x16x32xf32>, i32 -> vector<1x1x16x32xf32>
    %116 = arith.mulf %114, %42 : vector<1x1x16x32xf32>
    %117 = vector.broadcast %45 : vector<1x1x1x32xf32> to vector<1x1x16x32xf32>
    %118 = arith.mulf %113, %117 : vector<1x1x16x32xf32>
    %119 = arith.addf %116, %118 : vector<1x1x16x32xf32>
    %120 = arith.mulf %115, %50 : vector<1x1x16x32xf32>
    %121 = arith.addf %119, %120 : vector<1x1x16x32xf32>
    %122 = arith.addf %110, %121 : vector<1x1x16x32xf32>
    %123 = vector.broadcast %2 : vector<1x1x1x32xf32> to vector<1x1x16x32xf32>
    %124 = arith.addf %122, %123 : vector<1x1x16x32xf32>
    %c0_40 = arith.constant 0 : index
    %125 = arith.index_cast %c2_i32 : i32 to index
    %c0_41 = arith.constant 0 : index
    %c0_42 = arith.constant 0 : index
    %126 = vector.load %arg5[%c0_40, %125, %c0_41, %c0_42] : memref<1x16x16x32xf32, #tpu.memory_space<vmem>>, vector<1x1x16x32xf32>
    tpu.vector_store %arg5[%c0_40, %125, %c0_41, %c0_42], %124 {strides = array<i32>} : memref<1x16x16x32xf32, #tpu.memory_space<vmem>>, vector<1x1x16x32xf32>,
    %c3_i32 = arith.constant 3 : i32
    %c1_i32_43 = arith.constant 1 : i32
    %127 = arith.subi %c3_i32, %c1_i32_43 : i32
    %c0_44 = arith.constant 0 : index
    %128 = arith.index_cast %127 : i32 to index
    %c0_45 = arith.constant 0 : index
    %c0_46 = arith.constant 0 : index
    %129 = vector.load %arg2[%c0_44, %128, %c0_45, %c0_46] : memref<1x16x16x32xf32, #tpu.memory_space<vmem>>, vector<1x1x16x32xf32>
    %c1_i32_47 = arith.constant 1 : i32
    %130 = tpu.dynamic_rotate %129 by %c1_i32_47 dim 2 : vector<1x1x16x32xf32>, i32 -> vector<1x1x16x32xf32>
    %c15_i32_48 = arith.constant 15 : i32
    %131 = tpu.dynamic_rotate %129 by %c15_i32_48 dim 2 : vector<1x1x16x32xf32>, i32 -> vector<1x1x16x32xf32>
    %132 = arith.mulf %130, %16 : vector<1x1x16x32xf32>
    %133 = vector.broadcast %19 : vector<1x1x1x32xf32> to vector<1x1x16x32xf32>
    %134 = arith.mulf %129, %133 : vector<1x1x16x32xf32>
    %135 = arith.addf %132, %134 : vector<1x1x16x32xf32>
    %136 = arith.mulf %131, %24 : vector<1x1x16x32xf32>
    %137 = arith.addf %135, %136 : vector<1x1x16x32xf32>
    %c0_49 = arith.constant 0 : index
    %138 = arith.index_cast %c3_i32 : i32 to index
    %c0_50 = arith.constant 0 : index
    %c0_51 = arith.constant 0 : index
    %139 = vector.load %arg2[%c0_49, %138, %c0_50, %c0_51] : memref<1x16x16x32xf32, #tpu.memory_space<vmem>>, vector<1x1x16x32xf32>
    %c1_i32_52 = arith.constant 1 : i32
    %140 = tpu.dynamic_rotate %139 by %c1_i32_52 dim 2 : vector<1x1x16x32xf32>, i32 -> vector<1x1x16x32xf32>
    %c15_i32_53 = arith.constant 15 : i32
    %141 = tpu.dynamic_rotate %139 by %c15_i32_53 dim 2 : vector<1x1x16x32xf32>, i32 -> vector<1x1x16x32xf32>
    %142 = arith.mulf %140, %29 : vector<1x1x16x32xf32>
    %143 = vector.broadcast %32 : vector<1x1x1x32xf32> to vector<1x1x16x32xf32>
    %144 = arith.mulf %139, %143 : vector<1x1x16x32xf32>
    %145 = arith.addf %142, %144 : vector<1x1x16x32xf32>
    %146 = arith.mulf %141, %37 : vector<1x1x16x32xf32>
    %147 = arith.addf %145, %146 : vector<1x1x16x32xf32>
    %148 = arith.addf %137, %147 : vector<1x1x16x32xf32>
    %c1_i32_54 = arith.constant 1 : i32
    %149 = arith.addi %c3_i32, %c1_i32_54 : i32
    %c0_55 = arith.constant 0 : index
    %150 = arith.index_cast %149 : i32 to index
    %c0_56 = arith.constant 0 : index
    %c0_57 = arith.constant 0 : index
    %151 = vector.load %arg2[%c0_55, %150, %c0_56, %c0_57] : memref<1x16x16x32xf32, #tpu.memory_space<vmem>>, vector<1x1x16x32xf32>
    %c1_i32_58 = arith.constant 1 : i32
    %152 = tpu.dynamic_rotate %151 by %c1_i32_58 dim 2 : vector<1x1x16x32xf32>, i32 -> vector<1x1x16x32xf32>
    %c15_i32_59 = arith.constant 15 : i32
    %153 = tpu.dynamic_rotate %151 by %c15_i32_59 dim 2 : vector<1x1x16x32xf32>, i32 -> vector<1x1x16x32xf32>
    %154 = arith.mulf %152, %42 : vector<1x1x16x32xf32>
    %155 = vector.broadcast %45 : vector<1x1x1x32xf32> to vector<1x1x16x32xf32>
    %156 = arith.mulf %151, %155 : vector<1x1x16x32xf32>
    %157 = arith.addf %154, %156 : vector<1x1x16x32xf32>
    %158 = arith.mulf %153, %50 : vector<1x1x16x32xf32>
    %159 = arith.addf %157, %158 : vector<1x1x16x32xf32>
    %160 = arith.addf %148, %159 : vector<1x1x16x32xf32>
    %161 = vector.broadcast %2 : vector<1x1x1x32xf32> to vector<1x1x16x32xf32>
    %162 = arith.addf %160, %161 : vector<1x1x16x32xf32>
    %c0_60 = arith.constant 0 : index
    %163 = arith.index_cast %c3_i32 : i32 to index
    %c0_61 = arith.constant 0 : index
    %c0_62 = arith.constant 0 : index
    %164 = vector.load %arg5[%c0_60, %163, %c0_61, %c0_62] : memref<1x16x16x32xf32, #tpu.memory_space<vmem>>, vector<1x1x16x32xf32>
    tpu.vector_store %arg5[%c0_60, %163, %c0_61, %c0_62], %162 {strides = array<i32>} : memref<1x16x16x32xf32, #tpu.memory_space<vmem>>, vector<1x1x16x32xf32>,
    %c4_i32 = arith.constant 4 : i32
    %c1_i32_63 = arith.constant 1 : i32
    %165 = arith.subi %c4_i32, %c1_i32_63 : i32
    %c0_64 = arith.constant 0 : index
    %166 = arith.index_cast %165 : i32 to index
    %c0_65 = arith.constant 0 : index
    %c0_66 = arith.constant 0 : index
    %167 = vector.load %arg2[%c0_64, %166, %c0_65, %c0_66] : memref<1x16x16x32xf32, #tpu.memory_space<vmem>>, vector<1x1x16x32xf32>
    %c1_i32_67 = arith.constant 1 : i32
    %168 = tpu.dynamic_rotate %167 by %c1_i32_67 dim 2 : vector<1x1x16x32xf32>, i32 -> vector<1x1x16x32xf32>
    %c15_i32_68 = arith.constant 15 : i32
    %169 = tpu.dynamic_rotate %167 by %c15_i32_68 dim 2 : vector<1x1x16x32xf32>, i32 -> vector<1x1x16x32xf32>
    %170 = arith.mulf %168, %16 : vector<1x1x16x32xf32>
    %171 = vector.broadcast %19 : vector<1x1x1x32xf32> to vector<1x1x16x32xf32>
    %172 = arith.mulf %167, %171 : vector<1x1x16x32xf32>
    %173 = arith.addf %170, %172 : vector<1x1x16x32xf32>
    %174 = arith.mulf %169, %24 : vector<1x1x16x32xf32>
    %175 = arith.addf %173, %174 : vector<1x1x16x32xf32>
    %c0_69 = arith.constant 0 : index
    %176 = arith.index_cast %c4_i32 : i32 to index
    %c0_70 = arith.constant 0 : index
    %c0_71 = arith.constant 0 : index
    %177 = vector.load %arg2[%c0_69, %176, %c0_70, %c0_71] : memref<1x16x16x32xf32, #tpu.memory_space<vmem>>, vector<1x1x16x32xf32>
    %c1_i32_72 = arith.constant 1 : i32
    %178 = tpu.dynamic_rotate %177 by %c1_i32_72 dim 2 : vector<1x1x16x32xf32>, i32 -> vector<1x1x16x32xf32>
    %c15_i32_73 = arith.constant 15 : i32
    %179 = tpu.dynamic_rotate %177 by %c15_i32_73 dim 2 : vector<1x1x16x32xf32>, i32 -> vector<1x1x16x32xf32>
    %180 = arith.mulf %178, %29 : vector<1x1x16x32xf32>
    %181 = vector.broadcast %32 : vector<1x1x1x32xf32> to vector<1x1x16x32xf32>
    %182 = arith.mulf %177, %181 : vector<1x1x16x32xf32>
    %183 = arith.addf %180, %182 : vector<1x1x16x32xf32>
    %184 = arith.mulf %179, %37 : vector<1x1x16x32xf32>
    %185 = arith.addf %183, %184 : vector<1x1x16x32xf32>
    %186 = arith.addf %175, %185 : vector<1x1x16x32xf32>
    %c1_i32_74 = arith.constant 1 : i32
    %187 = arith.addi %c4_i32, %c1_i32_74 : i32
    %c0_75 = arith.constant 0 : index
    %188 = arith.index_cast %187 : i32 to index
    %c0_76 = arith.constant 0 : index
    %c0_77 = arith.constant 0 : index
    %189 = vector.load %arg2[%c0_75, %188, %c0_76, %c0_77] : memref<1x16x16x32xf32, #tpu.memory_space<vmem>>, vector<1x1x16x32xf32>
    %c1_i32_78 = arith.constant 1 : i32
    %190 = tpu.dynamic_rotate %189 by %c1_i32_78 dim 2 : vector<1x1x16x32xf32>, i32 -> vector<1x1x16x32xf32>
    %c15_i32_79 = arith.constant 15 : i32
    %191 = tpu.dynamic_rotate %189 by %c15_i32_79 dim 2 : vector<1x1x16x32xf32>, i32 -> vector<1x1x16x32xf32>
    %192 = arith.mulf %190, %42 : vector<1x1x16x32xf32>
    %193 = vector.broadcast %45 : vector<1x1x1x32xf32> to vector<1x1x16x32xf32>
    %194 = arith.mulf %189, %193 : vector<1x1x16x32xf32>
    %195 = arith.addf %192, %194 : vector<1x1x16x32xf32>
    %196 = arith.mulf %191, %50 : vector<1x1x16x32xf32>
    %197 = arith.addf %195, %196 : vector<1x1x16x32xf32>
    %198 = arith.addf %186, %197 : vector<1x1x16x32xf32>
    %199 = vector.broadcast %2 : vector<1x1x1x32xf32> to vector<1x1x16x32xf32>
    %200 = arith.addf %198, %199 : vector<1x1x16x32xf32>
    %c0_80 = arith.constant 0 : index
    %201 = arith.index_cast %c4_i32 : i32 to index
    %c0_81 = arith.constant 0 : index
    %c0_82 = arith.constant 0 : index
    %202 = vector.load %arg5[%c0_80, %201, %c0_81, %c0_82] : memref<1x16x16x32xf32, #tpu.memory_space<vmem>>, vector<1x1x16x32xf32>
    tpu.vector_store %arg5[%c0_80, %201, %c0_81, %c0_82], %200 {strides = array<i32>} : memref<1x16x16x32xf32, #tpu.memory_space<vmem>>, vector<1x1x16x32xf32>,
    %c5_i32 = arith.constant 5 : i32
    %c1_i32_83 = arith.constant 1 : i32
    %203 = arith.subi %c5_i32, %c1_i32_83 : i32
    %c0_84 = arith.constant 0 : index
    %204 = arith.index_cast %203 : i32 to index
    %c0_85 = arith.constant 0 : index
    %c0_86 = arith.constant 0 : index
    %205 = vector.load %arg2[%c0_84, %204, %c0_85, %c0_86] : memref<1x16x16x32xf32, #tpu.memory_space<vmem>>, vector<1x1x16x32xf32>
    %c1_i32_87 = arith.constant 1 : i32
    %206 = tpu.dynamic_rotate %205 by %c1_i32_87 dim 2 : vector<1x1x16x32xf32>, i32 -> vector<1x1x16x32xf32>
    %c15_i32_88 = arith.constant 15 : i32
    %207 = tpu.dynamic_rotate %205 by %c15_i32_88 dim 2 : vector<1x1x16x32xf32>, i32 -> vector<1x1x16x32xf32>
    %208 = arith.mulf %206, %16 : vector<1x1x16x32xf32>
    %209 = vector.broadcast %19 : vector<1x1x1x32xf32> to vector<1x1x16x32xf32>
    %210 = arith.mulf %205, %209 : vector<1x1x16x32xf32>
    %211 = arith.addf %208, %210 : vector<1x1x16x32xf32>
    %212 = arith.mulf %207, %24 : vector<1x1x16x32xf32>
    %213 = arith.addf %211, %212 : vector<1x1x16x32xf32>
    %c0_89 = arith.constant 0 : index
    %214 = arith.index_cast %c5_i32 : i32 to index
    %c0_90 = arith.constant 0 : index
    %c0_91 = arith.constant 0 : index
    %215 = vector.load %arg2[%c0_89, %214, %c0_90, %c0_91] : memref<1x16x16x32xf32, #tpu.memory_space<vmem>>, vector<1x1x16x32xf32>
    %c1_i32_92 = arith.constant 1 : i32
    %216 = tpu.dynamic_rotate %215 by %c1_i32_92 dim 2 : vector<1x1x16x32xf32>, i32 -> vector<1x1x16x32xf32>
    %c15_i32_93 = arith.constant 15 : i32
    %217 = tpu.dynamic_rotate %215 by %c15_i32_93 dim 2 : vector<1x1x16x32xf32>, i32 -> vector<1x1x16x32xf32>
    %218 = arith.mulf %216, %29 : vector<1x1x16x32xf32>
    %219 = vector.broadcast %32 : vector<1x1x1x32xf32> to vector<1x1x16x32xf32>
    %220 = arith.mulf %215, %219 : vector<1x1x16x32xf32>
    %221 = arith.addf %218, %220 : vector<1x1x16x32xf32>
    %222 = arith.mulf %217, %37 : vector<1x1x16x32xf32>
    %223 = arith.addf %221, %222 : vector<1x1x16x32xf32>
    %224 = arith.addf %213, %223 : vector<1x1x16x32xf32>
    %c1_i32_94 = arith.constant 1 : i32
    %225 = arith.addi %c5_i32, %c1_i32_94 : i32
    %c0_95 = arith.constant 0 : index
    %226 = arith.index_cast %225 : i32 to index
    %c0_96 = arith.constant 0 : index
    %c0_97 = arith.constant 0 : index
    %227 = vector.load %arg2[%c0_95, %226, %c0_96, %c0_97] : memref<1x16x16x32xf32, #tpu.memory_space<vmem>>, vector<1x1x16x32xf32>
    %c1_i32_98 = arith.constant 1 : i32
    %228 = tpu.dynamic_rotate %227 by %c1_i32_98 dim 2 : vector<1x1x16x32xf32>, i32 -> vector<1x1x16x32xf32>
    %c15_i32_99 = arith.constant 15 : i32
    %229 = tpu.dynamic_rotate %227 by %c15_i32_99 dim 2 : vector<1x1x16x32xf32>, i32 -> vector<1x1x16x32xf32>
    %230 = arith.mulf %228, %42 : vector<1x1x16x32xf32>
    %231 = vector.broadcast %45 : vector<1x1x1x32xf32> to vector<1x1x16x32xf32>
    %232 = arith.mulf %227, %231 : vector<1x1x16x32xf32>
    %233 = arith.addf %230, %232 : vector<1x1x16x32xf32>
    %234 = arith.mulf %229, %50 : vector<1x1x16x32xf32>
    %235 = arith.addf %233, %234 : vector<1x1x16x32xf32>
    %236 = arith.addf %224, %235 : vector<1x1x16x32xf32>
    %237 = vector.broadcast %2 : vector<1x1x1x32xf32> to vector<1x1x16x32xf32>
    %238 = arith.addf %236, %237 : vector<1x1x16x32xf32>
    %c0_100 = arith.constant 0 : index
    %239 = arith.index_cast %c5_i32 : i32 to index
    %c0_101 = arith.constant 0 : index
    %c0_102 = arith.constant 0 : index
    %240 = vector.load %arg5[%c0_100, %239, %c0_101, %c0_102] : memref<1x16x16x32xf32, #tpu.memory_space<vmem>>, vector<1x1x16x32xf32>
    tpu.vector_store %arg5[%c0_100, %239, %c0_101, %c0_102], %238 {strides = array<i32>} : memref<1x16x16x32xf32, #tpu.memory_space<vmem>>, vector<1x1x16x32xf32>,
    %c6_i32 = arith.constant 6 : i32
    %c1_i32_103 = arith.constant 1 : i32
    %241 = arith.subi %c6_i32, %c1_i32_103 : i32
    %c0_104 = arith.constant 0 : index
    %242 = arith.index_cast %241 : i32 to index
    %c0_105 = arith.constant 0 : index
    %c0_106 = arith.constant 0 : index
    %243 = vector.load %arg2[%c0_104, %242, %c0_105, %c0_106] : memref<1x16x16x32xf32, #tpu.memory_space<vmem>>, vector<1x1x16x32xf32>
    %c1_i32_107 = arith.constant 1 : i32
    %244 = tpu.dynamic_rotate %243 by %c1_i32_107 dim 2 : vector<1x1x16x32xf32>, i32 -> vector<1x1x16x32xf32>
    %c15_i32_108 = arith.constant 15 : i32
    %245 = tpu.dynamic_rotate %243 by %c15_i32_108 dim 2 : vector<1x1x16x32xf32>, i32 -> vector<1x1x16x32xf32>
    %246 = arith.mulf %244, %16 : vector<1x1x16x32xf32>
    %247 = vector.broadcast %19 : vector<1x1x1x32xf32> to vector<1x1x16x32xf32>
    %248 = arith.mulf %243, %247 : vector<1x1x16x32xf32>
    %249 = arith.addf %246, %248 : vector<1x1x16x32xf32>
    %250 = arith.mulf %245, %24 : vector<1x1x16x32xf32>
    %251 = arith.addf %249, %250 : vector<1x1x16x32xf32>
    %c0_109 = arith.constant 0 : index
    %252 = arith.index_cast %c6_i32 : i32 to index
    %c0_110 = arith.constant 0 : index
    %c0_111 = arith.constant 0 : index
    %253 = vector.load %arg2[%c0_109, %252, %c0_110, %c0_111] : memref<1x16x16x32xf32, #tpu.memory_space<vmem>>, vector<1x1x16x32xf32>
    %c1_i32_112 = arith.constant 1 : i32
    %254 = tpu.dynamic_rotate %253 by %c1_i32_112 dim 2 : vector<1x1x16x32xf32>, i32 -> vector<1x1x16x32xf32>
    %c15_i32_113 = arith.constant 15 : i32
    %255 = tpu.dynamic_rotate %253 by %c15_i32_113 dim 2 : vector<1x1x16x32xf32>, i32 -> vector<1x1x16x32xf32>
    %256 = arith.mulf %254, %29 : vector<1x1x16x32xf32>
    %257 = vector.broadcast %32 : vector<1x1x1x32xf32> to vector<1x1x16x32xf32>
    %258 = arith.mulf %253, %257 : vector<1x1x16x32xf32>
    %259 = arith.addf %256, %258 : vector<1x1x16x32xf32>
    %260 = arith.mulf %255, %37 : vector<1x1x16x32xf32>
    %261 = arith.addf %259, %260 : vector<1x1x16x32xf32>
    %262 = arith.addf %251, %261 : vector<1x1x16x32xf32>
    %c1_i32_114 = arith.constant 1 : i32
    %263 = arith.addi %c6_i32, %c1_i32_114 : i32
    %c0_115 = arith.constant 0 : index
    %264 = arith.index_cast %263 : i32 to index
    %c0_116 = arith.constant 0 : index
    %c0_117 = arith.constant 0 : index
    %265 = vector.load %arg2[%c0_115, %264, %c0_116, %c0_117] : memref<1x16x16x32xf32, #tpu.memory_space<vmem>>, vector<1x1x16x32xf32>
    %c1_i32_118 = arith.constant 1 : i32
    %266 = tpu.dynamic_rotate %265 by %c1_i32_118 dim 2 : vector<1x1x16x32xf32>, i32 -> vector<1x1x16x32xf32>
    %c15_i32_119 = arith.constant 15 : i32
    %267 = tpu.dynamic_rotate %265 by %c15_i32_119 dim 2 : vector<1x1x16x32xf32>, i32 -> vector<1x1x16x32xf32>
    %268 = arith.mulf %266, %42 : vector<1x1x16x32xf32>
    %269 = vector.broadcast %45 : vector<1x1x1x32xf32> to vector<1x1x16x32xf32>
    %270 = arith.mulf %265, %269 : vector<1x1x16x32xf32>
    %271 = arith.addf %268, %270 : vector<1x1x16x32xf32>
    %272 = arith.mulf %267, %50 : vector<1x1x16x32xf32>
    %273 = arith.addf %271, %272 : vector<1x1x16x32xf32>
    %274 = arith.addf %262, %273 : vector<1x1x16x32xf32>
    %275 = vector.broadcast %2 : vector<1x1x1x32xf32> to vector<1x1x16x32xf32>
    %276 = arith.addf %274, %275 : vector<1x1x16x32xf32>
    %c0_120 = arith.constant 0 : index
    %277 = arith.index_cast %c6_i32 : i32 to index
    %c0_121 = arith.constant 0 : index
    %c0_122 = arith.constant 0 : index
    %278 = vector.load %arg5[%c0_120, %277, %c0_121, %c0_122] : memref<1x16x16x32xf32, #tpu.memory_space<vmem>>, vector<1x1x16x32xf32>
    tpu.vector_store %arg5[%c0_120, %277, %c0_121, %c0_122], %276 {strides = array<i32>} : memref<1x16x16x32xf32, #tpu.memory_space<vmem>>, vector<1x1x16x32xf32>,
    %c7_i32 = arith.constant 7 : i32
    %c1_i32_123 = arith.constant 1 : i32
    %279 = arith.subi %c7_i32, %c1_i32_123 : i32
    %c0_124 = arith.constant 0 : index
    %280 = arith.index_cast %279 : i32 to index
    %c0_125 = arith.constant 0 : index
    %c0_126 = arith.constant 0 : index
    %281 = vector.load %arg2[%c0_124, %280, %c0_125, %c0_126] : memref<1x16x16x32xf32, #tpu.memory_space<vmem>>, vector<1x1x16x32xf32>
    %c1_i32_127 = arith.constant 1 : i32
    %282 = tpu.dynamic_rotate %281 by %c1_i32_127 dim 2 : vector<1x1x16x32xf32>, i32 -> vector<1x1x16x32xf32>
    %c15_i32_128 = arith.constant 15 : i32
    %283 = tpu.dynamic_rotate %281 by %c15_i32_128 dim 2 : vector<1x1x16x32xf32>, i32 -> vector<1x1x16x32xf32>
    %284 = arith.mulf %282, %16 : vector<1x1x16x32xf32>
    %285 = vector.broadcast %19 : vector<1x1x1x32xf32> to vector<1x1x16x32xf32>
    %286 = arith.mulf %281, %285 : vector<1x1x16x32xf32>
    %287 = arith.addf %284, %286 : vector<1x1x16x32xf32>
    %288 = arith.mulf %283, %24 : vector<1x1x16x32xf32>
    %289 = arith.addf %287, %288 : vector<1x1x16x32xf32>
    %c0_129 = arith.constant 0 : index
    %290 = arith.index_cast %c7_i32 : i32 to index
    %c0_130 = arith.constant 0 : index
    %c0_131 = arith.constant 0 : index
    %291 = vector.load %arg2[%c0_129, %290, %c0_130, %c0_131] : memref<1x16x16x32xf32, #tpu.memory_space<vmem>>, vector<1x1x16x32xf32>
    %c1_i32_132 = arith.constant 1 : i32
    %292 = tpu.dynamic_rotate %291 by %c1_i32_132 dim 2 : vector<1x1x16x32xf32>, i32 -> vector<1x1x16x32xf32>
    %c15_i32_133 = arith.constant 15 : i32
    %293 = tpu.dynamic_rotate %291 by %c15_i32_133 dim 2 : vector<1x1x16x32xf32>, i32 -> vector<1x1x16x32xf32>
    %294 = arith.mulf %292, %29 : vector<1x1x16x32xf32>
    %295 = vector.broadcast %32 : vector<1x1x1x32xf32> to vector<1x1x16x32xf32>
    %296 = arith.mulf %291, %295 : vector<1x1x16x32xf32>
    %297 = arith.addf %294, %296 : vector<1x1x16x32xf32>
    %298 = arith.mulf %293, %37 : vector<1x1x16x32xf32>
    %299 = arith.addf %297, %298 : vector<1x1x16x32xf32>
    %300 = arith.addf %289, %299 : vector<1x1x16x32xf32>
    %c1_i32_134 = arith.constant 1 : i32
    %301 = arith.addi %c7_i32, %c1_i32_134 : i32
    %c0_135 = arith.constant 0 : index
    %302 = arith.index_cast %301 : i32 to index
    %c0_136 = arith.constant 0 : index
    %c0_137 = arith.constant 0 : index
    %303 = vector.load %arg2[%c0_135, %302, %c0_136, %c0_137] : memref<1x16x16x32xf32, #tpu.memory_space<vmem>>, vector<1x1x16x32xf32>
    %c1_i32_138 = arith.constant 1 : i32
    %304 = tpu.dynamic_rotate %303 by %c1_i32_138 dim 2 : vector<1x1x16x32xf32>, i32 -> vector<1x1x16x32xf32>
    %c15_i32_139 = arith.constant 15 : i32
    %305 = tpu.dynamic_rotate %303 by %c15_i32_139 dim 2 : vector<1x1x16x32xf32>, i32 -> vector<1x1x16x32xf32>
    %306 = arith.mulf %304, %42 : vector<1x1x16x32xf32>
    %307 = vector.broadcast %45 : vector<1x1x1x32xf32> to vector<1x1x16x32xf32>
    %308 = arith.mulf %303, %307 : vector<1x1x16x32xf32>
    %309 = arith.addf %306, %308 : vector<1x1x16x32xf32>
    %310 = arith.mulf %305, %50 : vector<1x1x16x32xf32>
    %311 = arith.addf %309, %310 : vector<1x1x16x32xf32>
    %312 = arith.addf %300, %311 : vector<1x1x16x32xf32>
    %313 = vector.broadcast %2 : vector<1x1x1x32xf32> to vector<1x1x16x32xf32>
    %314 = arith.addf %312, %313 : vector<1x1x16x32xf32>
    %c0_140 = arith.constant 0 : index
    %315 = arith.index_cast %c7_i32 : i32 to index
    %c0_141 = arith.constant 0 : index
    %c0_142 = arith.constant 0 : index
    %316 = vector.load %arg5[%c0_140, %315, %c0_141, %c0_142] : memref<1x16x16x32xf32, #tpu.memory_space<vmem>>, vector<1x1x16x32xf32>
    tpu.vector_store %arg5[%c0_140, %315, %c0_141, %c0_142], %314 {strides = array<i32>} : memref<1x16x16x32xf32, #tpu.memory_space<vmem>>, vector<1x1x16x32xf32>,
    %c8_i32 = arith.constant 8 : i32
    %c1_i32_143 = arith.constant 1 : i32
    %317 = arith.subi %c8_i32, %c1_i32_143 : i32
    %c0_144 = arith.constant 0 : index
    %318 = arith.index_cast %317 : i32 to index
    %c0_145 = arith.constant 0 : index
    %c0_146 = arith.constant 0 : index
    %319 = vector.load %arg2[%c0_144, %318, %c0_145, %c0_146] : memref<1x16x16x32xf32, #tpu.memory_space<vmem>>, vector<1x1x16x32xf32>
    %c1_i32_147 = arith.constant 1 : i32
    %320 = tpu.dynamic_rotate %319 by %c1_i32_147 dim 2 : vector<1x1x16x32xf32>, i32 -> vector<1x1x16x32xf32>
    %c15_i32_148 = arith.constant 15 : i32
    %321 = tpu.dynamic_rotate %319 by %c15_i32_148 dim 2 : vector<1x1x16x32xf32>, i32 -> vector<1x1x16x32xf32>
    %322 = arith.mulf %320, %16 : vector<1x1x16x32xf32>
    %323 = vector.broadcast %19 : vector<1x1x1x32xf32> to vector<1x1x16x32xf32>
    %324 = arith.mulf %319, %323 : vector<1x1x16x32xf32>
    %325 = arith.addf %322, %324 : vector<1x1x16x32xf32>
    %326 = arith.mulf %321, %24 : vector<1x1x16x32xf32>
    %327 = arith.addf %325, %326 : vector<1x1x16x32xf32>
    %c0_149 = arith.constant 0 : index
    %328 = arith.index_cast %c8_i32 : i32 to index
    %c0_150 = arith.constant 0 : index
    %c0_151 = arith.constant 0 : index
    %329 = vector.load %arg2[%c0_149, %328, %c0_150, %c0_151] : memref<1x16x16x32xf32, #tpu.memory_space<vmem>>, vector<1x1x16x32xf32>
    %c1_i32_152 = arith.constant 1 : i32
    %330 = tpu.dynamic_rotate %329 by %c1_i32_152 dim 2 : vector<1x1x16x32xf32>, i32 -> vector<1x1x16x32xf32>
    %c15_i32_153 = arith.constant 15 : i32
    %331 = tpu.dynamic_rotate %329 by %c15_i32_153 dim 2 : vector<1x1x16x32xf32>, i32 -> vector<1x1x16x32xf32>
    %332 = arith.mulf %330, %29 : vector<1x1x16x32xf32>
    %333 = vector.broadcast %32 : vector<1x1x1x32xf32> to vector<1x1x16x32xf32>
    %334 = arith.mulf %329, %333 : vector<1x1x16x32xf32>
    %335 = arith.addf %332, %334 : vector<1x1x16x32xf32>
    %336 = arith.mulf %331, %37 : vector<1x1x16x32xf32>
    %337 = arith.addf %335, %336 : vector<1x1x16x32xf32>
    %338 = arith.addf %327, %337 : vector<1x1x16x32xf32>
    %c1_i32_154 = arith.constant 1 : i32
    %339 = arith.addi %c8_i32, %c1_i32_154 : i32
    %c0_155 = arith.constant 0 : index
    %340 = arith.index_cast %339 : i32 to index
    %c0_156 = arith.constant 0 : index
    %c0_157 = arith.constant 0 : index
    %341 = vector.load %arg2[%c0_155, %340, %c0_156, %c0_157] : memref<1x16x16x32xf32, #tpu.memory_space<vmem>>, vector<1x1x16x32xf32>
    %c1_i32_158 = arith.constant 1 : i32
    %342 = tpu.dynamic_rotate %341 by %c1_i32_158 dim 2 : vector<1x1x16x32xf32>, i32 -> vector<1x1x16x32xf32>
    %c15_i32_159 = arith.constant 15 : i32
    %343 = tpu.dynamic_rotate %341 by %c15_i32_159 dim 2 : vector<1x1x16x32xf32>, i32 -> vector<1x1x16x32xf32>
    %344 = arith.mulf %342, %42 : vector<1x1x16x32xf32>
    %345 = vector.broadcast %45 : vector<1x1x1x32xf32> to vector<1x1x16x32xf32>
    %346 = arith.mulf %341, %345 : vector<1x1x16x32xf32>
    %347 = arith.addf %344, %346 : vector<1x1x16x32xf32>
    %348 = arith.mulf %343, %50 : vector<1x1x16x32xf32>
    %349 = arith.addf %347, %348 : vector<1x1x16x32xf32>
    %350 = arith.addf %338, %349 : vector<1x1x16x32xf32>
    %351 = vector.broadcast %2 : vector<1x1x1x32xf32> to vector<1x1x16x32xf32>
    %352 = arith.addf %350, %351 : vector<1x1x16x32xf32>
    %c0_160 = arith.constant 0 : index
    %353 = arith.index_cast %c8_i32 : i32 to index
    %c0_161 = arith.constant 0 : index
    %c0_162 = arith.constant 0 : index
    %354 = vector.load %arg5[%c0_160, %353, %c0_161, %c0_162] : memref<1x16x16x32xf32, #tpu.memory_space<vmem>>, vector<1x1x16x32xf32>
    tpu.vector_store %arg5[%c0_160, %353, %c0_161, %c0_162], %352 {strides = array<i32>} : memref<1x16x16x32xf32, #tpu.memory_space<vmem>>, vector<1x1x16x32xf32>,
    %c9_i32 = arith.constant 9 : i32
    %c1_i32_163 = arith.constant 1 : i32
    %355 = arith.subi %c9_i32, %c1_i32_163 : i32
    %c0_164 = arith.constant 0 : index
    %356 = arith.index_cast %355 : i32 to index
    %c0_165 = arith.constant 0 : index
    %c0_166 = arith.constant 0 : index
    %357 = vector.load %arg2[%c0_164, %356, %c0_165, %c0_166] : memref<1x16x16x32xf32, #tpu.memory_space<vmem>>, vector<1x1x16x32xf32>
    %c1_i32_167 = arith.constant 1 : i32
    %358 = tpu.dynamic_rotate %357 by %c1_i32_167 dim 2 : vector<1x1x16x32xf32>, i32 -> vector<1x1x16x32xf32>
    %c15_i32_168 = arith.constant 15 : i32
    %359 = tpu.dynamic_rotate %357 by %c15_i32_168 dim 2 : vector<1x1x16x32xf32>, i32 -> vector<1x1x16x32xf32>
    %360 = arith.mulf %358, %16 : vector<1x1x16x32xf32>
    %361 = vector.broadcast %19 : vector<1x1x1x32xf32> to vector<1x1x16x32xf32>
    %362 = arith.mulf %357, %361 : vector<1x1x16x32xf32>
    %363 = arith.addf %360, %362 : vector<1x1x16x32xf32>
    %364 = arith.mulf %359, %24 : vector<1x1x16x32xf32>
    %365 = arith.addf %363, %364 : vector<1x1x16x32xf32>
    %c0_169 = arith.constant 0 : index
    %366 = arith.index_cast %c9_i32 : i32 to index
    %c0_170 = arith.constant 0 : index
    %c0_171 = arith.constant 0 : index
    %367 = vector.load %arg2[%c0_169, %366, %c0_170, %c0_171] : memref<1x16x16x32xf32, #tpu.memory_space<vmem>>, vector<1x1x16x32xf32>
    %c1_i32_172 = arith.constant 1 : i32
    %368 = tpu.dynamic_rotate %367 by %c1_i32_172 dim 2 : vector<1x1x16x32xf32>, i32 -> vector<1x1x16x32xf32>
    %c15_i32_173 = arith.constant 15 : i32
    %369 = tpu.dynamic_rotate %367 by %c15_i32_173 dim 2 : vector<1x1x16x32xf32>, i32 -> vector<1x1x16x32xf32>
    %370 = arith.mulf %368, %29 : vector<1x1x16x32xf32>
    %371 = vector.broadcast %32 : vector<1x1x1x32xf32> to vector<1x1x16x32xf32>
    %372 = arith.mulf %367, %371 : vector<1x1x16x32xf32>
    %373 = arith.addf %370, %372 : vector<1x1x16x32xf32>
    %374 = arith.mulf %369, %37 : vector<1x1x16x32xf32>
    %375 = arith.addf %373, %374 : vector<1x1x16x32xf32>
    %376 = arith.addf %365, %375 : vector<1x1x16x32xf32>
    %c1_i32_174 = arith.constant 1 : i32
    %377 = arith.addi %c9_i32, %c1_i32_174 : i32
    %c0_175 = arith.constant 0 : index
    %378 = arith.index_cast %377 : i32 to index
    %c0_176 = arith.constant 0 : index
    %c0_177 = arith.constant 0 : index
    %379 = vector.load %arg2[%c0_175, %378, %c0_176, %c0_177] : memref<1x16x16x32xf32, #tpu.memory_space<vmem>>, vector<1x1x16x32xf32>
    %c1_i32_178 = arith.constant 1 : i32
    %380 = tpu.dynamic_rotate %379 by %c1_i32_178 dim 2 : vector<1x1x16x32xf32>, i32 -> vector<1x1x16x32xf32>
    %c15_i32_179 = arith.constant 15 : i32
    %381 = tpu.dynamic_rotate %379 by %c15_i32_179 dim 2 : vector<1x1x16x32xf32>, i32 -> vector<1x1x16x32xf32>
    %382 = arith.mulf %380, %42 : vector<1x1x16x32xf32>
    %383 = vector.broadcast %45 : vector<1x1x1x32xf32> to vector<1x1x16x32xf32>
    %384 = arith.mulf %379, %383 : vector<1x1x16x32xf32>
    %385 = arith.addf %382, %384 : vector<1x1x16x32xf32>
    %386 = arith.mulf %381, %50 : vector<1x1x16x32xf32>
    %387 = arith.addf %385, %386 : vector<1x1x16x32xf32>
    %388 = arith.addf %376, %387 : vector<1x1x16x32xf32>
    %389 = vector.broadcast %2 : vector<1x1x1x32xf32> to vector<1x1x16x32xf32>
    %390 = arith.addf %388, %389 : vector<1x1x16x32xf32>
    %c0_180 = arith.constant 0 : index
    %391 = arith.index_cast %c9_i32 : i32 to index
    %c0_181 = arith.constant 0 : index
    %c0_182 = arith.constant 0 : index
    %392 = vector.load %arg5[%c0_180, %391, %c0_181, %c0_182] : memref<1x16x16x32xf32, #tpu.memory_space<vmem>>, vector<1x1x16x32xf32>
    tpu.vector_store %arg5[%c0_180, %391, %c0_181, %c0_182], %390 {strides = array<i32>} : memref<1x16x16x32xf32, #tpu.memory_space<vmem>>, vector<1x1x16x32xf32>,
    %c10_i32 = arith.constant 10 : i32
    %c1_i32_183 = arith.constant 1 : i32
    %393 = arith.subi %c10_i32, %c1_i32_183 : i32
    %c0_184 = arith.constant 0 : index
    %394 = arith.index_cast %393 : i32 to index
    %c0_185 = arith.constant 0 : index
    %c0_186 = arith.constant 0 : index
    %395 = vector.load %arg2[%c0_184, %394, %c0_185, %c0_186] : memref<1x16x16x32xf32, #tpu.memory_space<vmem>>, vector<1x1x16x32xf32>
    %c1_i32_187 = arith.constant 1 : i32
    %396 = tpu.dynamic_rotate %395 by %c1_i32_187 dim 2 : vector<1x1x16x32xf32>, i32 -> vector<1x1x16x32xf32>
    %c15_i32_188 = arith.constant 15 : i32
    %397 = tpu.dynamic_rotate %395 by %c15_i32_188 dim 2 : vector<1x1x16x32xf32>, i32 -> vector<1x1x16x32xf32>
    %398 = arith.mulf %396, %16 : vector<1x1x16x32xf32>
    %399 = vector.broadcast %19 : vector<1x1x1x32xf32> to vector<1x1x16x32xf32>
    %400 = arith.mulf %395, %399 : vector<1x1x16x32xf32>
    %401 = arith.addf %398, %400 : vector<1x1x16x32xf32>
    %402 = arith.mulf %397, %24 : vector<1x1x16x32xf32>
    %403 = arith.addf %401, %402 : vector<1x1x16x32xf32>
    %c0_189 = arith.constant 0 : index
    %404 = arith.index_cast %c10_i32 : i32 to index
    %c0_190 = arith.constant 0 : index
    %c0_191 = arith.constant 0 : index
    %405 = vector.load %arg2[%c0_189, %404, %c0_190, %c0_191] : memref<1x16x16x32xf32, #tpu.memory_space<vmem>>, vector<1x1x16x32xf32>
    %c1_i32_192 = arith.constant 1 : i32
    %406 = tpu.dynamic_rotate %405 by %c1_i32_192 dim 2 : vector<1x1x16x32xf32>, i32 -> vector<1x1x16x32xf32>
    %c15_i32_193 = arith.constant 15 : i32
    %407 = tpu.dynamic_rotate %405 by %c15_i32_193 dim 2 : vector<1x1x16x32xf32>, i32 -> vector<1x1x16x32xf32>
    %408 = arith.mulf %406, %29 : vector<1x1x16x32xf32>
    %409 = vector.broadcast %32 : vector<1x1x1x32xf32> to vector<1x1x16x32xf32>
    %410 = arith.mulf %405, %409 : vector<1x1x16x32xf32>
    %411 = arith.addf %408, %410 : vector<1x1x16x32xf32>
    %412 = arith.mulf %407, %37 : vector<1x1x16x32xf32>
    %413 = arith.addf %411, %412 : vector<1x1x16x32xf32>
    %414 = arith.addf %403, %413 : vector<1x1x16x32xf32>
    %c1_i32_194 = arith.constant 1 : i32
    %415 = arith.addi %c10_i32, %c1_i32_194 : i32
    %c0_195 = arith.constant 0 : index
    %416 = arith.index_cast %415 : i32 to index
    %c0_196 = arith.constant 0 : index
    %c0_197 = arith.constant 0 : index
    %417 = vector.load %arg2[%c0_195, %416, %c0_196, %c0_197] : memref<1x16x16x32xf32, #tpu.memory_space<vmem>>, vector<1x1x16x32xf32>
    %c1_i32_198 = arith.constant 1 : i32
    %418 = tpu.dynamic_rotate %417 by %c1_i32_198 dim 2 : vector<1x1x16x32xf32>, i32 -> vector<1x1x16x32xf32>
    %c15_i32_199 = arith.constant 15 : i32
    %419 = tpu.dynamic_rotate %417 by %c15_i32_199 dim 2 : vector<1x1x16x32xf32>, i32 -> vector<1x1x16x32xf32>
    %420 = arith.mulf %418, %42 : vector<1x1x16x32xf32>
    %421 = vector.broadcast %45 : vector<1x1x1x32xf32> to vector<1x1x16x32xf32>
    %422 = arith.mulf %417, %421 : vector<1x1x16x32xf32>
    %423 = arith.addf %420, %422 : vector<1x1x16x32xf32>
    %424 = arith.mulf %419, %50 : vector<1x1x16x32xf32>
    %425 = arith.addf %423, %424 : vector<1x1x16x32xf32>
    %426 = arith.addf %414, %425 : vector<1x1x16x32xf32>
    %427 = vector.broadcast %2 : vector<1x1x1x32xf32> to vector<1x1x16x32xf32>
    %428 = arith.addf %426, %427 : vector<1x1x16x32xf32>
    %c0_200 = arith.constant 0 : index
    %429 = arith.index_cast %c10_i32 : i32 to index
    %c0_201 = arith.constant 0 : index
    %c0_202 = arith.constant 0 : index
    %430 = vector.load %arg5[%c0_200, %429, %c0_201, %c0_202] : memref<1x16x16x32xf32, #tpu.memory_space<vmem>>, vector<1x1x16x32xf32>
    tpu.vector_store %arg5[%c0_200, %429, %c0_201, %c0_202], %428 {strides = array<i32>} : memref<1x16x16x32xf32, #tpu.memory_space<vmem>>, vector<1x1x16x32xf32>,
    %c11_i32 = arith.constant 11 : i32
    %c1_i32_203 = arith.constant 1 : i32
    %431 = arith.subi %c11_i32, %c1_i32_203 : i32
    %c0_204 = arith.constant 0 : index
    %432 = arith.index_cast %431 : i32 to index
    %c0_205 = arith.constant 0 : index
    %c0_206 = arith.constant 0 : index
    %433 = vector.load %arg2[%c0_204, %432, %c0_205, %c0_206] : memref<1x16x16x32xf32, #tpu.memory_space<vmem>>, vector<1x1x16x32xf32>
    %c1_i32_207 = arith.constant 1 : i32
    %434 = tpu.dynamic_rotate %433 by %c1_i32_207 dim 2 : vector<1x1x16x32xf32>, i32 -> vector<1x1x16x32xf32>
    %c15_i32_208 = arith.constant 15 : i32
    %435 = tpu.dynamic_rotate %433 by %c15_i32_208 dim 2 : vector<1x1x16x32xf32>, i32 -> vector<1x1x16x32xf32>
    %436 = arith.mulf %434, %16 : vector<1x1x16x32xf32>
    %437 = vector.broadcast %19 : vector<1x1x1x32xf32> to vector<1x1x16x32xf32>
    %438 = arith.mulf %433, %437 : vector<1x1x16x32xf32>
    %439 = arith.addf %436, %438 : vector<1x1x16x32xf32>
    %440 = arith.mulf %435, %24 : vector<1x1x16x32xf32>
    %441 = arith.addf %439, %440 : vector<1x1x16x32xf32>
    %c0_209 = arith.constant 0 : index
    %442 = arith.index_cast %c11_i32 : i32 to index
    %c0_210 = arith.constant 0 : index
    %c0_211 = arith.constant 0 : index
    %443 = vector.load %arg2[%c0_209, %442, %c0_210, %c0_211] : memref<1x16x16x32xf32, #tpu.memory_space<vmem>>, vector<1x1x16x32xf32>
    %c1_i32_212 = arith.constant 1 : i32
    %444 = tpu.dynamic_rotate %443 by %c1_i32_212 dim 2 : vector<1x1x16x32xf32>, i32 -> vector<1x1x16x32xf32>
    %c15_i32_213 = arith.constant 15 : i32
    %445 = tpu.dynamic_rotate %443 by %c15_i32_213 dim 2 : vector<1x1x16x32xf32>, i32 -> vector<1x1x16x32xf32>
    %446 = arith.mulf %444, %29 : vector<1x1x16x32xf32>
    %447 = vector.broadcast %32 : vector<1x1x1x32xf32> to vector<1x1x16x32xf32>
    %448 = arith.mulf %443, %447 : vector<1x1x16x32xf32>
    %449 = arith.addf %446, %448 : vector<1x1x16x32xf32>
    %450 = arith.mulf %445, %37 : vector<1x1x16x32xf32>
    %451 = arith.addf %449, %450 : vector<1x1x16x32xf32>
    %452 = arith.addf %441, %451 : vector<1x1x16x32xf32>
    %c1_i32_214 = arith.constant 1 : i32
    %453 = arith.addi %c11_i32, %c1_i32_214 : i32
    %c0_215 = arith.constant 0 : index
    %454 = arith.index_cast %453 : i32 to index
    %c0_216 = arith.constant 0 : index
    %c0_217 = arith.constant 0 : index
    %455 = vector.load %arg2[%c0_215, %454, %c0_216, %c0_217] : memref<1x16x16x32xf32, #tpu.memory_space<vmem>>, vector<1x1x16x32xf32>
    %c1_i32_218 = arith.constant 1 : i32
    %456 = tpu.dynamic_rotate %455 by %c1_i32_218 dim 2 : vector<1x1x16x32xf32>, i32 -> vector<1x1x16x32xf32>
    %c15_i32_219 = arith.constant 15 : i32
    %457 = tpu.dynamic_rotate %455 by %c15_i32_219 dim 2 : vector<1x1x16x32xf32>, i32 -> vector<1x1x16x32xf32>
    %458 = arith.mulf %456, %42 : vector<1x1x16x32xf32>
    %459 = vector.broadcast %45 : vector<1x1x1x32xf32> to vector<1x1x16x32xf32>
    %460 = arith.mulf %455, %459 : vector<1x1x16x32xf32>
    %461 = arith.addf %458, %460 : vector<1x1x16x32xf32>
    %462 = arith.mulf %457, %50 : vector<1x1x16x32xf32>
    %463 = arith.addf %461, %462 : vector<1x1x16x32xf32>
    %464 = arith.addf %452, %463 : vector<1x1x16x32xf32>
    %465 = vector.broadcast %2 : vector<1x1x1x32xf32> to vector<1x1x16x32xf32>
    %466 = arith.addf %464, %465 : vector<1x1x16x32xf32>
    %c0_220 = arith.constant 0 : index
    %467 = arith.index_cast %c11_i32 : i32 to index
    %c0_221 = arith.constant 0 : index
    %c0_222 = arith.constant 0 : index
    %468 = vector.load %arg5[%c0_220, %467, %c0_221, %c0_222] : memref<1x16x16x32xf32, #tpu.memory_space<vmem>>, vector<1x1x16x32xf32>
    tpu.vector_store %arg5[%c0_220, %467, %c0_221, %c0_222], %466 {strides = array<i32>} : memref<1x16x16x32xf32, #tpu.memory_space<vmem>>, vector<1x1x16x32xf32>,
    %c12_i32 = arith.constant 12 : i32
    %c1_i32_223 = arith.constant 1 : i32
    %469 = arith.subi %c12_i32, %c1_i32_223 : i32
    %c0_224 = arith.constant 0 : index
    %470 = arith.index_cast %469 : i32 to index
    %c0_225 = arith.constant 0 : index
    %c0_226 = arith.constant 0 : index
    %471 = vector.load %arg2[%c0_224, %470, %c0_225, %c0_226] : memref<1x16x16x32xf32, #tpu.memory_space<vmem>>, vector<1x1x16x32xf32>
    %c1_i32_227 = arith.constant 1 : i32
    %472 = tpu.dynamic_rotate %471 by %c1_i32_227 dim 2 : vector<1x1x16x32xf32>, i32 -> vector<1x1x16x32xf32>
    %c15_i32_228 = arith.constant 15 : i32
    %473 = tpu.dynamic_rotate %471 by %c15_i32_228 dim 2 : vector<1x1x16x32xf32>, i32 -> vector<1x1x16x32xf32>
    %474 = arith.mulf %472, %16 : vector<1x1x16x32xf32>
    %475 = vector.broadcast %19 : vector<1x1x1x32xf32> to vector<1x1x16x32xf32>
    %476 = arith.mulf %471, %475 : vector<1x1x16x32xf32>
    %477 = arith.addf %474, %476 : vector<1x1x16x32xf32>
    %478 = arith.mulf %473, %24 : vector<1x1x16x32xf32>
    %479 = arith.addf %477, %478 : vector<1x1x16x32xf32>
    %c0_229 = arith.constant 0 : index
    %480 = arith.index_cast %c12_i32 : i32 to index
    %c0_230 = arith.constant 0 : index
    %c0_231 = arith.constant 0 : index
    %481 = vector.load %arg2[%c0_229, %480, %c0_230, %c0_231] : memref<1x16x16x32xf32, #tpu.memory_space<vmem>>, vector<1x1x16x32xf32>
    %c1_i32_232 = arith.constant 1 : i32
    %482 = tpu.dynamic_rotate %481 by %c1_i32_232 dim 2 : vector<1x1x16x32xf32>, i32 -> vector<1x1x16x32xf32>
    %c15_i32_233 = arith.constant 15 : i32
    %483 = tpu.dynamic_rotate %481 by %c15_i32_233 dim 2 : vector<1x1x16x32xf32>, i32 -> vector<1x1x16x32xf32>
    %484 = arith.mulf %482, %29 : vector<1x1x16x32xf32>
    %485 = vector.broadcast %32 : vector<1x1x1x32xf32> to vector<1x1x16x32xf32>
    %486 = arith.mulf %481, %485 : vector<1x1x16x32xf32>
    %487 = arith.addf %484, %486 : vector<1x1x16x32xf32>
    %488 = arith.mulf %483, %37 : vector<1x1x16x32xf32>
    %489 = arith.addf %487, %488 : vector<1x1x16x32xf32>
    %490 = arith.addf %479, %489 : vector<1x1x16x32xf32>
    %c1_i32_234 = arith.constant 1 : i32
    %491 = arith.addi %c12_i32, %c1_i32_234 : i32
    %c0_235 = arith.constant 0 : index
    %492 = arith.index_cast %491 : i32 to index
    %c0_236 = arith.constant 0 : index
    %c0_237 = arith.constant 0 : index
    %493 = vector.load %arg2[%c0_235, %492, %c0_236, %c0_237] : memref<1x16x16x32xf32, #tpu.memory_space<vmem>>, vector<1x1x16x32xf32>
    %c1_i32_238 = arith.constant 1 : i32
    %494 = tpu.dynamic_rotate %493 by %c1_i32_238 dim 2 : vector<1x1x16x32xf32>, i32 -> vector<1x1x16x32xf32>
    %c15_i32_239 = arith.constant 15 : i32
    %495 = tpu.dynamic_rotate %493 by %c15_i32_239 dim 2 : vector<1x1x16x32xf32>, i32 -> vector<1x1x16x32xf32>
    %496 = arith.mulf %494, %42 : vector<1x1x16x32xf32>
    %497 = vector.broadcast %45 : vector<1x1x1x32xf32> to vector<1x1x16x32xf32>
    %498 = arith.mulf %493, %497 : vector<1x1x16x32xf32>
    %499 = arith.addf %496, %498 : vector<1x1x16x32xf32>
    %500 = arith.mulf %495, %50 : vector<1x1x16x32xf32>
    %501 = arith.addf %499, %500 : vector<1x1x16x32xf32>
    %502 = arith.addf %490, %501 : vector<1x1x16x32xf32>
    %503 = vector.broadcast %2 : vector<1x1x1x32xf32> to vector<1x1x16x32xf32>
    %504 = arith.addf %502, %503 : vector<1x1x16x32xf32>
    %c0_240 = arith.constant 0 : index
    %505 = arith.index_cast %c12_i32 : i32 to index
    %c0_241 = arith.constant 0 : index
    %c0_242 = arith.constant 0 : index
    %506 = vector.load %arg5[%c0_240, %505, %c0_241, %c0_242] : memref<1x16x16x32xf32, #tpu.memory_space<vmem>>, vector<1x1x16x32xf32>
    tpu.vector_store %arg5[%c0_240, %505, %c0_241, %c0_242], %504 {strides = array<i32>} : memref<1x16x16x32xf32, #tpu.memory_space<vmem>>, vector<1x1x16x32xf32>,
    %c13_i32 = arith.constant 13 : i32
    %c1_i32_243 = arith.constant 1 : i32
    %507 = arith.subi %c13_i32, %c1_i32_243 : i32
    %c0_244 = arith.constant 0 : index
    %508 = arith.index_cast %507 : i32 to index
    %c0_245 = arith.constant 0 : index
    %c0_246 = arith.constant 0 : index
    %509 = vector.load %arg2[%c0_244, %508, %c0_245, %c0_246] : memref<1x16x16x32xf32, #tpu.memory_space<vmem>>, vector<1x1x16x32xf32>
    %c1_i32_247 = arith.constant 1 : i32
    %510 = tpu.dynamic_rotate %509 by %c1_i32_247 dim 2 : vector<1x1x16x32xf32>, i32 -> vector<1x1x16x32xf32>
    %c15_i32_248 = arith.constant 15 : i32
    %511 = tpu.dynamic_rotate %509 by %c15_i32_248 dim 2 : vector<1x1x16x32xf32>, i32 -> vector<1x1x16x32xf32>
    %512 = arith.mulf %510, %16 : vector<1x1x16x32xf32>
    %513 = vector.broadcast %19 : vector<1x1x1x32xf32> to vector<1x1x16x32xf32>
    %514 = arith.mulf %509, %513 : vector<1x1x16x32xf32>
    %515 = arith.addf %512, %514 : vector<1x1x16x32xf32>
    %516 = arith.mulf %511, %24 : vector<1x1x16x32xf32>
    %517 = arith.addf %515, %516 : vector<1x1x16x32xf32>
    %c0_249 = arith.constant 0 : index
    %518 = arith.index_cast %c13_i32 : i32 to index
    %c0_250 = arith.constant 0 : index
    %c0_251 = arith.constant 0 : index
    %519 = vector.load %arg2[%c0_249, %518, %c0_250, %c0_251] : memref<1x16x16x32xf32, #tpu.memory_space<vmem>>, vector<1x1x16x32xf32>
    %c1_i32_252 = arith.constant 1 : i32
    %520 = tpu.dynamic_rotate %519 by %c1_i32_252 dim 2 : vector<1x1x16x32xf32>, i32 -> vector<1x1x16x32xf32>
    %c15_i32_253 = arith.constant 15 : i32
    %521 = tpu.dynamic_rotate %519 by %c15_i32_253 dim 2 : vector<1x1x16x32xf32>, i32 -> vector<1x1x16x32xf32>
    %522 = arith.mulf %520, %29 : vector<1x1x16x32xf32>
    %523 = vector.broadcast %32 : vector<1x1x1x32xf32> to vector<1x1x16x32xf32>
    %524 = arith.mulf %519, %523 : vector<1x1x16x32xf32>
    %525 = arith.addf %522, %524 : vector<1x1x16x32xf32>
    %526 = arith.mulf %521, %37 : vector<1x1x16x32xf32>
    %527 = arith.addf %525, %526 : vector<1x1x16x32xf32>
    %528 = arith.addf %517, %527 : vector<1x1x16x32xf32>
    %c1_i32_254 = arith.constant 1 : i32
    %529 = arith.addi %c13_i32, %c1_i32_254 : i32
    %c0_255 = arith.constant 0 : index
    %530 = arith.index_cast %529 : i32 to index
    %c0_256 = arith.constant 0 : index
    %c0_257 = arith.constant 0 : index
    %531 = vector.load %arg2[%c0_255, %530, %c0_256, %c0_257] : memref<1x16x16x32xf32, #tpu.memory_space<vmem>>, vector<1x1x16x32xf32>
    %c1_i32_258 = arith.constant 1 : i32
    %532 = tpu.dynamic_rotate %531 by %c1_i32_258 dim 2 : vector<1x1x16x32xf32>, i32 -> vector<1x1x16x32xf32>
    %c15_i32_259 = arith.constant 15 : i32
    %533 = tpu.dynamic_rotate %531 by %c15_i32_259 dim 2 : vector<1x1x16x32xf32>, i32 -> vector<1x1x16x32xf32>
    %534 = arith.mulf %532, %42 : vector<1x1x16x32xf32>
    %535 = vector.broadcast %45 : vector<1x1x1x32xf32> to vector<1x1x16x32xf32>
    %536 = arith.mulf %531, %535 : vector<1x1x16x32xf32>
    %537 = arith.addf %534, %536 : vector<1x1x16x32xf32>
    %538 = arith.mulf %533, %50 : vector<1x1x16x32xf32>
    %539 = arith.addf %537, %538 : vector<1x1x16x32xf32>
    %540 = arith.addf %528, %539 : vector<1x1x16x32xf32>
    %541 = vector.broadcast %2 : vector<1x1x1x32xf32> to vector<1x1x16x32xf32>
    %542 = arith.addf %540, %541 : vector<1x1x16x32xf32>
    %c0_260 = arith.constant 0 : index
    %543 = arith.index_cast %c13_i32 : i32 to index
    %c0_261 = arith.constant 0 : index
    %c0_262 = arith.constant 0 : index
    %544 = vector.load %arg5[%c0_260, %543, %c0_261, %c0_262] : memref<1x16x16x32xf32, #tpu.memory_space<vmem>>, vector<1x1x16x32xf32>
    tpu.vector_store %arg5[%c0_260, %543, %c0_261, %c0_262], %542 {strides = array<i32>} : memref<1x16x16x32xf32, #tpu.memory_space<vmem>>, vector<1x1x16x32xf32>,
    %c14_i32_263 = arith.constant 14 : i32
    %c1_i32_264 = arith.constant 1 : i32
    %545 = arith.subi %c14_i32_263, %c1_i32_264 : i32
    %c0_265 = arith.constant 0 : index
    %546 = arith.index_cast %545 : i32 to index
    %c0_266 = arith.constant 0 : index
    %c0_267 = arith.constant 0 : index
    %547 = vector.load %arg2[%c0_265, %546, %c0_266, %c0_267] : memref<1x16x16x32xf32, #tpu.memory_space<vmem>>, vector<1x1x16x32xf32>
    %c1_i32_268 = arith.constant 1 : i32
    %548 = tpu.dynamic_rotate %547 by %c1_i32_268 dim 2 : vector<1x1x16x32xf32>, i32 -> vector<1x1x16x32xf32>
    %c15_i32_269 = arith.constant 15 : i32
    %549 = tpu.dynamic_rotate %547 by %c15_i32_269 dim 2 : vector<1x1x16x32xf32>, i32 -> vector<1x1x16x32xf32>
    %550 = arith.mulf %548, %16 : vector<1x1x16x32xf32>
    %551 = vector.broadcast %19 : vector<1x1x1x32xf32> to vector<1x1x16x32xf32>
    %552 = arith.mulf %547, %551 : vector<1x1x16x32xf32>
    %553 = arith.addf %550, %552 : vector<1x1x16x32xf32>
    %554 = arith.mulf %549, %24 : vector<1x1x16x32xf32>
    %555 = arith.addf %553, %554 : vector<1x1x16x32xf32>
    %c0_270 = arith.constant 0 : index
    %556 = arith.index_cast %c14_i32_263 : i32 to index
    %c0_271 = arith.constant 0 : index
    %c0_272 = arith.constant 0 : index
    %557 = vector.load %arg2[%c0_270, %556, %c0_271, %c0_272] : memref<1x16x16x32xf32, #tpu.memory_space<vmem>>, vector<1x1x16x32xf32>
    %c1_i32_273 = arith.constant 1 : i32
    %558 = tpu.dynamic_rotate %557 by %c1_i32_273 dim 2 : vector<1x1x16x32xf32>, i32 -> vector<1x1x16x32xf32>
    %c15_i32_274 = arith.constant 15 : i32
    %559 = tpu.dynamic_rotate %557 by %c15_i32_274 dim 2 : vector<1x1x16x32xf32>, i32 -> vector<1x1x16x32xf32>
    %560 = arith.mulf %558, %29 : vector<1x1x16x32xf32>
    %561 = vector.broadcast %32 : vector<1x1x1x32xf32> to vector<1x1x16x32xf32>
    %562 = arith.mulf %557, %561 : vector<1x1x16x32xf32>
    %563 = arith.addf %560, %562 : vector<1x1x16x32xf32>
    %564 = arith.mulf %559, %37 : vector<1x1x16x32xf32>
    %565 = arith.addf %563, %564 : vector<1x1x16x32xf32>
    %566 = arith.addf %555, %565 : vector<1x1x16x32xf32>
    %c1_i32_275 = arith.constant 1 : i32
    %567 = arith.addi %c14_i32_263, %c1_i32_275 : i32
    %c0_276 = arith.constant 0 : index
    %568 = arith.index_cast %567 : i32 to index
    %c0_277 = arith.constant 0 : index
    %c0_278 = arith.constant 0 : index
    %569 = vector.load %arg2[%c0_276, %568, %c0_277, %c0_278] : memref<1x16x16x32xf32, #tpu.memory_space<vmem>>, vector<1x1x16x32xf32>
    %c1_i32_279 = arith.constant 1 : i32
    %570 = tpu.dynamic_rotate %569 by %c1_i32_279 dim 2 : vector<1x1x16x32xf32>, i32 -> vector<1x1x16x32xf32>
    %c15_i32_280 = arith.constant 15 : i32
    %571 = tpu.dynamic_rotate %569 by %c15_i32_280 dim 2 : vector<1x1x16x32xf32>, i32 -> vector<1x1x16x32xf32>
    %572 = arith.mulf %570, %42 : vector<1x1x16x32xf32>
    %573 = vector.broadcast %45 : vector<1x1x1x32xf32> to vector<1x1x16x32xf32>
    %574 = arith.mulf %569, %573 : vector<1x1x16x32xf32>
    %575 = arith.addf %572, %574 : vector<1x1x16x32xf32>
    %576 = arith.mulf %571, %50 : vector<1x1x16x32xf32>
    %577 = arith.addf %575, %576 : vector<1x1x16x32xf32>
    %578 = arith.addf %566, %577 : vector<1x1x16x32xf32>
    %579 = vector.broadcast %2 : vector<1x1x1x32xf32> to vector<1x1x16x32xf32>
    %580 = arith.addf %578, %579 : vector<1x1x16x32xf32>
    %c0_281 = arith.constant 0 : index
    %581 = arith.index_cast %c14_i32_263 : i32 to index
    %c0_282 = arith.constant 0 : index
    %c0_283 = arith.constant 0 : index
    %582 = vector.load %arg5[%c0_281, %581, %c0_282, %c0_283] : memref<1x16x16x32xf32, #tpu.memory_space<vmem>>, vector<1x1x16x32xf32>
    tpu.vector_store %arg5[%c0_281, %581, %c0_282, %c0_283], %580 {strides = array<i32>} : memref<1x16x16x32xf32, #tpu.memory_space<vmem>>, vector<1x1x16x32xf32>,
    %c14_i32_284 = arith.constant 14 : i32
    %c0_285 = arith.constant 0 : index
    %c0_286 = arith.constant 0 : index
    %c0_287 = arith.constant 0 : index
    %c0_288 = arith.constant 0 : index
    %583 = vector.load %arg2[%c0_285, %c0_286, %c0_287, %c0_288] : memref<1x16x16x32xf32, #tpu.memory_space<vmem>>, vector<1x1x16x32xf32>
    %c1_i32_289 = arith.constant 1 : i32
    %584 = tpu.dynamic_rotate %583 by %c1_i32_289 dim 2 : vector<1x1x16x32xf32>, i32 -> vector<1x1x16x32xf32>
    %c15_i32_290 = arith.constant 15 : i32
    %585 = tpu.dynamic_rotate %583 by %c15_i32_290 dim 2 : vector<1x1x16x32xf32>, i32 -> vector<1x1x16x32xf32>
    %586 = arith.mulf %584, %29 : vector<1x1x16x32xf32>
    %587 = vector.broadcast %32 : vector<1x1x1x32xf32> to vector<1x1x16x32xf32>
    %588 = arith.mulf %583, %587 : vector<1x1x16x32xf32>
    %589 = arith.addf %586, %588 : vector<1x1x16x32xf32>
    %590 = arith.mulf %585, %37 : vector<1x1x16x32xf32>
    %591 = arith.addf %589, %590 : vector<1x1x16x32xf32>
    %c0_291 = arith.constant 0 : index
    %c1 = arith.constant 1 : index
    %c0_292 = arith.constant 0 : index
    %c0_293 = arith.constant 0 : index
    %592 = vector.load %arg2[%c0_291, %c1, %c0_292, %c0_293] : memref<1x16x16x32xf32, #tpu.memory_space<vmem>>, vector<1x1x16x32xf32>
    %c1_i32_294 = arith.constant 1 : i32
    %593 = tpu.dynamic_rotate %592 by %c1_i32_294 dim 2 : vector<1x1x16x32xf32>, i32 -> vector<1x1x16x32xf32>
    %c15_i32_295 = arith.constant 15 : i32
    %594 = tpu.dynamic_rotate %592 by %c15_i32_295 dim 2 : vector<1x1x16x32xf32>, i32 -> vector<1x1x16x32xf32>
    %595 = arith.mulf %593, %42 : vector<1x1x16x32xf32>
    %596 = vector.broadcast %45 : vector<1x1x1x32xf32> to vector<1x1x16x32xf32>
    %597 = arith.mulf %592, %596 : vector<1x1x16x32xf32>
    %598 = arith.addf %595, %597 : vector<1x1x16x32xf32>
    %599 = arith.mulf %594, %50 : vector<1x1x16x32xf32>
    %600 = arith.addf %598, %599 : vector<1x1x16x32xf32>
    %601 = arith.addf %591, %600 : vector<1x1x16x32xf32>
    %602 = vector.broadcast %2 : vector<1x1x1x32xf32> to vector<1x1x16x32xf32>
    %603 = arith.addf %601, %602 : vector<1x1x16x32xf32>
    %c0_296 = arith.constant 0 : index
    %c0_297 = arith.constant 0 : index
    %c0_298 = arith.constant 0 : index
    %c0_299 = arith.constant 0 : index
    %604 = vector.load %arg5[%c0_296, %c0_297, %c0_298, %c0_299] : memref<1x16x16x32xf32, #tpu.memory_space<vmem>>, vector<1x1x16x32xf32>
    tpu.vector_store %arg5[%c0_296, %c0_297, %c0_298, %c0_299], %603 {strides = array<i32>} : memref<1x16x16x32xf32, #tpu.memory_space<vmem>>, vector<1x1x16x32xf32>,
    %c0_300 = arith.constant 0 : index
    %c14 = arith.constant 14 : index
    %c0_301 = arith.constant 0 : index
    %c0_302 = arith.constant 0 : index
    %605 = vector.load %arg2[%c0_300, %c14, %c0_301, %c0_302] : memref<1x16x16x32xf32, #tpu.memory_space<vmem>>, vector<1x1x16x32xf32>
    %c1_i32_303 = arith.constant 1 : i32
    %606 = tpu.dynamic_rotate %605 by %c1_i32_303 dim 2 : vector<1x1x16x32xf32>, i32 -> vector<1x1x16x32xf32>
    %c15_i32_304 = arith.constant 15 : i32
    %607 = tpu.dynamic_rotate %605 by %c15_i32_304 dim 2 : vector<1x1x16x32xf32>, i32 -> vector<1x1x16x32xf32>
    %608 = arith.mulf %606, %16 : vector<1x1x16x32xf32>
    %609 = vector.broadcast %19 : vector<1x1x1x32xf32> to vector<1x1x16x32xf32>
    %610 = arith.mulf %605, %609 : vector<1x1x16x32xf32>
    %611 = arith.addf %608, %610 : vector<1x1x16x32xf32>
    %612 = arith.mulf %607, %24 : vector<1x1x16x32xf32>
    %613 = arith.addf %611, %612 : vector<1x1x16x32xf32>
    %c0_305 = arith.constant 0 : index
    %c15 = arith.constant 15 : index
    %c0_306 = arith.constant 0 : index
    %c0_307 = arith.constant 0 : index
    %614 = vector.load %arg2[%c0_305, %c15, %c0_306, %c0_307] : memref<1x16x16x32xf32, #tpu.memory_space<vmem>>, vector<1x1x16x32xf32>
    %c1_i32_308 = arith.constant 1 : i32
    %615 = tpu.dynamic_rotate %614 by %c1_i32_308 dim 2 : vector<1x1x16x32xf32>, i32 -> vector<1x1x16x32xf32>
    %c15_i32_309 = arith.constant 15 : i32
    %616 = tpu.dynamic_rotate %614 by %c15_i32_309 dim 2 : vector<1x1x16x32xf32>, i32 -> vector<1x1x16x32xf32>
    %617 = arith.mulf %615, %29 : vector<1x1x16x32xf32>
    %618 = vector.broadcast %32 : vector<1x1x1x32xf32> to vector<1x1x16x32xf32>
    %619 = arith.mulf %614, %618 : vector<1x1x16x32xf32>
    %620 = arith.addf %617, %619 : vector<1x1x16x32xf32>
    %621 = arith.mulf %616, %37 : vector<1x1x16x32xf32>
    %622 = arith.addf %620, %621 : vector<1x1x16x32xf32>
    %623 = arith.addf %613, %622 : vector<1x1x16x32xf32>
    %624 = vector.broadcast %2 : vector<1x1x1x32xf32> to vector<1x1x16x32xf32>
    %625 = arith.addf %623, %624 : vector<1x1x16x32xf32>
    %c0_310 = arith.constant 0 : index
    %c15_311 = arith.constant 15 : index
    %c0_312 = arith.constant 0 : index
    %c0_313 = arith.constant 0 : index
    %626 = vector.load %arg5[%c0_310, %c15_311, %c0_312, %c0_313] : memref<1x16x16x32xf32, #tpu.memory_space<vmem>>, vector<1x1x16x32xf32>
    tpu.vector_store %arg5[%c0_310, %c15_311, %c0_312, %c0_313], %625 {strides = array<i32>} : memref<1x16x16x32xf32, #tpu.memory_space<vmem>>, vector<1x1x16x32xf32>,
    return
  }
  func.func @transform_0(%arg0: i32, %arg1: i32) -> (i32, i32, i32, i32) {
    %c0_i32 = arith.constant 0 : i32
    %c0_i32_0 = arith.constant 0 : i32
    %c0_i32_1 = arith.constant 0 : i32
    return %arg0, %c0_i32, %c0_i32_0, %arg1 : i32, i32, i32, i32
  }
  func.func @transform_1(%arg0: i32, %arg1: i32) -> (i32, i32) {
    %c0_i32 = arith.constant 0 : i32
    %c0_i32_0 = arith.constant 0 : i32
    return %c0_i32, %arg1 : i32, i32
  }
  func.func @transform_2(%arg0: i32, %arg1: i32) -> (i32, i32) {
    %c0_i32 = arith.constant 0 : i32
    %c0_i32_0 = arith.constant 0 : i32
    return %c0_i32, %arg1 : i32, i32
  }
  func.func @transform_3(%arg0: i32, %arg1: i32) -> (i32, i32, i32, i32) {
    %c0_i32 = arith.constant 0 : i32
    %c0_i32_0 = arith.constant 0 : i32
    %c0_i32_1 = arith.constant 0 : i32
    return %arg0, %c0_i32, %c0_i32_0, %arg1 : i32, i32, i32, i32
  }
}

</mosaic_0001>

<llo_original>
// kernel: tpu_custom_call.1
$region0: #{tpu_custom_call.1}
  #allocation0 [shape = 'u32[]', space=smem, size = 0x4, offset = 0x4, fixed_abs, tag = 'smem constant byte address 0x4 - core index']
  #allocation1 [shape = 'u32[144,128]{1,0:T(1,128)}', space=vmem, size = 0x12000, scoped, tag = 'internal scratch']
  %s0 = inlined_call_operand.hbm [shape: f32[2,16,16,32], index: 0, kind: input, shape index: {}]
  %s1 = inlined_call_operand.hbm [shape: f32[9,32], index: 1, kind: input, shape index: {}]
  %s2 = inlined_call_operand.vmem [shape: f32[1,32], index: 2, kind: input, shape index: {}]
  %s3 = inlined_call_operand.hbm [shape: f32[2,16,16,32], index: 3, kind: output, shape index: {}]
  %s4 = sld [smem:[#allocation0]]
  $region53: #{tpu_custom_call.1} parent=0
    _
  %s6 = ssub.s32 1, %s4
  %s7 = scalar_select 0, %s6, %s4
  $region1: #{tpu_custom_call.1} parent=0
    #allocation2 [shape = 'u8[262144]{0}', space=vmem, size = 0x40000, scoped, tag = 'input window, operand 0']
    #allocation3 [shape = 's32[2]{0}', space=sflag, size = 0x8, scoped, tag = 'scoped memory for tpu_custom_call.1']
    #allocation4 [shape = 's32[2]{0}', space=sflag, size = 0x8, scoped, tag = 'scoped memory for tpu_custom_call.1']
    #allocation5 [shape = 'u8[8192]{0}', space=vmem, size = 0x2000, scoped, tag = 'input window, operand 1, single buffered']
    #allocation6 [shape = 's32[1]{0}', space=sflag, size = 0x4, scoped, tag = 'scoped memory for tpu_custom_call.1']
    #allocation7 [shape = 'u8[262144]{0}', space=vmem, size = 0x40000, scoped, tag = 'output window, operand 0']
    %8 = vsyncpa [#allocation3], 0
    %s9 = scalar_lea.sflag [#allocation3], 1
    %10 = vsyncpa %s9, 0
    %11 = vsyncpa [#allocation6], 0
    %12 = vsyncpa [#allocation4], 0
    %s13 = scalar_lea.sflag [#allocation4], 1
    %14 = vsyncpa %s13, 0
    loop: start=0, step=1, limit=4
    $region2: #{tpu_custom_call.1} parent=1 // loop_pre_header
      _
    $region3: #{tpu_custom_call.1} parent=1 // loop_header
      %s16 = sphi 0, %s20
      %p17 = scmp.ge.s32.totalorder %s16, 4
      %s23 = sphi 0, %s35
      %s24 = sphi 0, %s31
      %s25 = sphi 0, %s23
      %s26 = sphi 0, %s24
      %s27 = sphi 0, %s25
      %s28 = sphi 0, %s26
      %s40 = sphi 0, %s42
      %s43 = sphi 0, %s40
      %s44 = sphi 0, %s43
      %s60 = sphi 0, %s44
      %s66 = sphi 0, %s68
      %s69 = sphi 0, %s66
      %s70 = sphi 0, %s69
      %s86 = sphi 0, %s70
      %s92 = sphi 0, %s94
      %s95 = sphi 0, %s92
      %s96 = sphi 0, %s95
      %s112 = sphi 0, %s96
      %s120 = sphi 0, %s122
      %s123 = sphi 0, %s120
      %s124 = sphi 0, %s123
      %s140 = sphi 0, %s124
    $region4: #{tpu_custom_call.1} parent=1 // loop_header_branch
      %19 = sbr.rel (%p17) target = $region8
    $region5: #{tpu_custom_call.1} parent=1 // loop_body
      %s21 = ssub.s32 %s16, 1
      %s22 = ssub.s32 %s16, 2
      %s29 = sadd.s32 1, %s24
      %p30 = scmp.ge.s32.totalorder %s29, 1
      %s31 = scalar_select %p30, 0, %s29
      %s32 = sadd.s32 1, %s23
      %s33 = scalar_select %p30, %s32, %s23
      %p34 = scmp.ge.s32.totalorder %s33, 2
      %s35 = scalar_select %p34, 0, %s33
      %s36 = ssub.s32 %s23, %s35
      %s37 = ssub.s32 %s24, %s31
      %s38 = sor.u32 %s36, %s37
      %p39 = scmp.eq.s32.totalorder %s38, 0
      %s41 = sadd.s32 %s40, 1
      %s42 = scalar_select %p39, %s40, %s41
      %p45 = pneg %p39
      %p46 = scmp.eq.s32.totalorder %s16, 1
      %p47 = por %p45, %p46
      %p48 = scmp.ne.s32.totalorder %s40, %s43
      %p49 = scmp.eq.s32.totalorder %s16, 0
      %p50 = por %p48, %p49
      %p51 = scmp.ne.s32.totalorder %s40, %s43
      %p52 = scmp.eq.s32.totalorder %s21, 1
      %p53 = por %p51, %p52
      %p54 = scmp.ne.s32.totalorder %s43, %s44
      %p55 = scmp.eq.s32.totalorder %s21, 0
      %p56 = por %p54, %p55
      %p57 = scmp.ne.s32.totalorder %s43, %s44
      %p58 = scmp.eq.s32.totalorder %s22, 1
      %p59 = por %p57, %p58
      %p61 = scmp.ne.s32.totalorder %s44, %s60
      %p62 = scmp.eq.s32.totalorder %s22, 0
      %p63 = por %p61, %p62
      %s64 = ssub.s32 %s24, %s31
      %p65 = scmp.eq.s32.totalorder %s64, 0
      %s67 = sadd.s32 %s66, 1
      %s68 = scalar_select %p65, %s66, %s67
      %p71 = pneg %p65
      %p72 = scmp.eq.s32.totalorder %s16, 1
      %p73 = por %p71, %p72
      %p74 = scmp.ne.s32.totalorder %s66, %s69
      %p75 = scmp.eq.s32.totalorder %s16, 0
      %p76 = por %p74, %p75
      %p77 = scmp.ne.s32.totalorder %s66, %s69
      %p78 = scmp.eq.s32.totalorder %s21, 1
      %p79 = por %p77, %p78
      %p80 = scmp.ne.s32.totalorder %s69, %s70
      %p81 = scmp.eq.s32.totalorder %s21, 0
      %p82 = por %p80, %p81
      %p83 = scmp.ne.s32.totalorder %s69, %s70
      %p84 = scmp.eq.s32.totalorder %s22, 1
      %p85 = por %p83, %p84
      %p87 = scmp.ne.s32.totalorder %s70, %s86
      %p88 = scmp.eq.s32.totalorder %s22, 0
      %p89 = por %p87, %p88
      %s90 = ssub.s32 %s24, %s31
      %p91 = scmp.eq.s32.totalorder %s90, 0
      %s93 = sadd.s32 %s92, 1
      %s94 = scalar_select %p91, %s92, %s93
      %p97 = pneg %p91
      %p98 = scmp.eq.s32.totalorder %s16, 1
      %p99 = por %p97, %p98
      %p100 = scmp.ne.s32.totalorder %s92, %s95
      %p101 = scmp.eq.s32.totalorder %s16, 0
      %p102 = por %p100, %p101
      %p103 = scmp.ne.s32.totalorder %s92, %s95
      %p104 = scmp.eq.s32.totalorder %s21, 1
      %p105 = por %p103, %p104
      %p106 = scmp.ne.s32.totalorder %s95, %s96
      %p107 = scmp.eq.s32.totalorder %s21, 0
      %p108 = por %p106, %p107
      %p109 = scmp.ne.s32.totalorder %s95, %s96
      %p110 = scmp.eq.s32.totalorder %s22, 1
      %p111 = por %p109, %p110
      %p113 = scmp.ne.s32.totalorder %s96, %s112
      %p114 = scmp.eq.s32.totalorder %s22, 0
      %p115 = por %p113, %p114
      %s116 = ssub.s32 %s23, %s35
      %s117 = ssub.s32 %s24, %s31
      %s118 = sor.u32 %s116, %s117
      %p119 = scmp.eq.s32.totalorder %s118, 0
      %s121 = sadd.s32 %s120, 1
      %s122 = scalar_select %p119, %s120, %s121
      %p125 = pneg %p119
      %p126 = scmp.eq.s32.totalorder %s16, 1
      %p127 = por %p125, %p126
      %p128 = scmp.ne.s32.totalorder %s120, %s123
      %p129 = scmp.eq.s32.totalorder %s16, 0
      %p130 = por %p128, %p129
      %p131 = scmp.ne.s32.totalorder %s120, %s123
      %p132 = scmp.eq.s32.totalorder %s21, 1
      %p133 = por %p131, %p132
      %p134 = scmp.ne.s32.totalorder %s123, %s124
      %p135 = scmp.eq.s32.totalorder %s21, 0
      %p136 = por %p134, %p135
      %p137 = scmp.ne.s32.totalorder %s123, %s124
      %p138 = scmp.eq.s32.totalorder %s22, 1
      %p139 = por %p137, %p138
      %p141 = scmp.ne.s32.totalorder %s124, %s140
      %p142 = scmp.eq.s32.totalorder %s22, 0
      %p143 = por %p141, %p142
      %p144 = scmp.le.s32.totalorder 1, %s16
      %p145 = scmp.lt.s32.totalorder %s16, 3
      %p146 = pnand %p144, %p145
      %p147 = pneg %p146
      // Predicated region
      $region9: #{tpu_custom_call.1} parent=5 // pred_check
        _
      $region10: #{tpu_custom_call.1} parent=5 // pred_check_branch
        %149 = sbr.rel (%p146) target = $region12
      $region11: #{tpu_custom_call.1} parent=5 // pred_region
        %s150 = ssub.s32 %s16, 1
        // Predicated region
        $region13: #{tpu_custom_call.1} parent=11 // pred_check
          %p151 = pneg %p82
        $region14: #{tpu_custom_call.1} parent=11 // pred_check_branch
          %153 = sbr.rel (%p151) target = $region16
        $region15: #{tpu_custom_call.1} parent=11 // pred_region
          %s155 = ssub.s32 256, 256
          %156 = vsyncadd [#allocation6], %s155
          %s157 = smul.addr %s26, 128
          %s158 = scalar_lea.hbm %s1, %s157
          %s159 = sshll.u32 [#allocation5], 4
          %s160 = int_to_ptr.vmem [resolvable:$true] %s159
          %165 = dma.hbm_to_vmem [thread:$0]  %s158, 256, %s160, [#allocation6], 128, 128, 8
        $region16: #{tpu_custom_call.1} parent=11 // pred_fallthru
          _
        // Predicated region
        $region17: #{tpu_custom_call.1} parent=11 // pred_check
          %p166 = pneg %p108
        $region18: #{tpu_custom_call.1} parent=11 // pred_check_branch
          %168 = sbr.rel (%p166) target = $region20
        $region19: #{tpu_custom_call.1} parent=11 // pred_region
          %p169 = scmp.lt.s32.totalorder %s26, 0
          %s170 = scalar_select %p169, %s26, 0
          %s171 = scalar_lea.vmem %s2, %s170
        $region20: #{tpu_custom_call.1} parent=11 // pred_fallthru
          _
      $region12: #{tpu_custom_call.1} parent=5 // pred_fallthru
        _
      %p172 = scmp.lt.s32.totalorder %s16, 2
      // Predicated region
      $region21: #{tpu_custom_call.1} parent=5 // pred_check
        %p173 = pneg %p172
      $region22: #{tpu_custom_call.1} parent=5 // pred_check_branch
        %175 = sbr.rel (%p173) target = $region24
      $region23: #{tpu_custom_call.1} parent=5 // pred_region
        // Predicated region
        $region25: #{tpu_custom_call.1} parent=23 // pred_check
          %p176 = pneg %p50
        $region26: #{tpu_custom_call.1} parent=23 // pred_check_branch
          %178 = sbr.rel (%p176) target = $region28
        $region27: #{tpu_custom_call.1} parent=23 // pred_region
          %s179 = sand.u32 %s40, 1
          %s180 = scalar_lea.sflag [#allocation3], %s179
          %s181 = sand.u32 %s40, 1
          %s182 = smul.addr %s181, 256
          %s183 = scalar_lea.vmem [#allocation2], %s182
          %s185 = ssub.s32 4096, 4096
          %186 = vsyncadd %s180, %s185
          %s187 = smul.addr %s23, 32
          %s188 = sadd.s32 %s24, %s187
          %s189 = smul.addr %s188, 128
          %s190 = scalar_lea.hbm %s0, %s189
          %s191 = sshll.u32 %s183, 4
          %s192 = int_to_ptr.vmem [resolvable:$true] %s191
          %197 = dma.hbm_to_vmem [thread:$0]  %s190, 4096, %s192, %s180, 128, 128, 8
        $region28: #{tpu_custom_call.1} parent=23 // pred_fallthru
          _
      $region24: #{tpu_custom_call.1} parent=5 // pred_fallthru
        _
      %p198 = scmp.le.s32.totalorder 1, %s16
      %p199 = scmp.lt.s32.totalorder %s16, 3
      %p200 = pnand %p198, %p199
      %p201 = pneg %p200
      // Predicated region
      $region29: #{tpu_custom_call.1} parent=5 // pred_check
        _
      $region30: #{tpu_custom_call.1} parent=5 // pred_check_branch
        %203 = sbr.rel (%p200) target = $region32
      $region31: #{tpu_custom_call.1} parent=5 // pred_region
        %s204 = ssub.s32 %s16, 1
        %s205 = sand.u32 %s43, 1
        %s206 = scalar_lea.sflag [#allocation3], %s205
        %s207 = sand.u32 %s43, 1
        %s208 = smul.addr %s207, 256
        %s209 = scalar_lea.vmem [#allocation2], %s208
        // Predicated region
        $region33: #{tpu_custom_call.1} parent=31 // pred_check
          %p210 = pneg %p56
        $region34: #{tpu_custom_call.1} parent=31 // pred_check_branch
          %212 = sbr.rel (%p210) target = $region36
        $region35: #{tpu_custom_call.1} parent=31 // pred_region
          %213 = dma.done %s206, 4096
        $region36: #{tpu_custom_call.1} parent=31 // pred_fallthru
          _
        // Predicated region
        $region37: #{tpu_custom_call.1} parent=31 // pred_check
          %p214 = pneg %p82
        $region38: #{tpu_custom_call.1} parent=31 // pred_check_branch
          %216 = sbr.rel (%p214) target = $region40
        $region39: #{tpu_custom_call.1} parent=31 // pred_region
          %217 = dma.done [#allocation6], 256
        $region40: #{tpu_custom_call.1} parent=31 // pred_fallthru
          _
        %s218 = sand.u32 %s43, 1
        %s219 = scalar_lea.sflag [#allocation3], %s218
        %s220 = sand.u32 %s43, 1
        %s221 = smul.addr %s220, 256
        %s222 = scalar_lea.vmem [#allocation2], %s221
        %p223 = pneg %p56
        %p224 = pneg %p53
        %p225 = pneg %p82
        %p226 = pneg %p79
        %p227 = scmp.lt.s32.totalorder %s26, 0
        %s228 = scalar_select %p227, %s26, 0
        %s229 = scalar_lea.vmem %s2, %s228
        %p230 = pneg %p108
        %p231 = pneg %p105
        %p232 = pneg %p136
        %p233 = pneg %p133
        %s234 = sand.u32 %s123, 1
        %s235 = scalar_lea.sflag [#allocation4], %s234
        %s236 = sand.u32 %s123, 1
        %s237 = smul.addr %s236, 256
        %s238 = scalar_lea.vmem [#allocation7], %s237
        %p239 = scmp.lt.s32.totalorder %s26, 0
        %s240 = scalar_select %p239, %s26, 0
        %s241 = scalar_lea.vmem %s2, %s240
        %v242 = vld [vmem:[#allocation5] sm:$0xff]
        %v243 = vld [vmem:[#allocation5 + $0x8] sm:$0x1]
        %v244 = vld [vmem:[%s241] sm:$0x1]
        %v245 = vlaneseq
        %v246 = vshrl.u32 %v245, 7
        %v247 = vadd.s32 %v246, 8
        %vm248 = vcmp.ge.s32.totalorder %v246, 1
        %vm249 = vcmp.ge.s32.totalorder %v247, 1
        %v250 = vsel %vm248, 1, 0
        %v251 = vsel %vm249, 1, 0
        %v252 = vcvt.s32.f32 %v250
        %v253 = vcvt.s32.f32 %v251
        %vm254 = vcmp.le.s32.totalorder %v246, 14
        %vm255 = vcmp.le.s32.totalorder %v247, 14
        %v256 = vsel %vm254, 1, 0
        %v257 = vsel %vm255, 1, 0
        %v258 = vcvt.s32.f32 %v256
        %v259 = vcvt.s32.f32 %v257
        %v260 = vlaneseq
        %v261 = vshrl.u32 %v260, 7
        %v262 = vsub.s32 0, %v261
        %v263 = vrot.slane %v242, %v262
        %v264 = vmul.f32 %v252, %v263
        %v265 = vmul.f32 %v253, %v263
        %v266 = vlaneseq
        %v267 = vshrl.u32 %v266, 7
        %v268 = vsub.s32 2, %v267
        %v269 = vrot.slane %v242, %v268
        %v270 = vmul.f32 %v258, %v269
        %v271 = vmul.f32 %v259, %v269
        %v272 = vlaneseq
        %v273 = vshrl.u32 %v272, 7
        %v274 = vsub.s32 3, %v273
        %v275 = vrot.slane %v242, %v274
        %v276 = vmul.f32 %v252, %v275
        %v277 = vmul.f32 %v253, %v275
        %v278 = vlaneseq
        %v279 = vshrl.u32 %v278, 7
        %v280 = vsub.s32 5, %v279
        %v281 = vrot.slane %v242, %v280
        %v282 = vmul.f32 %v258, %v281
        %v283 = vmul.f32 %v259, %v281
        %v284 = vlaneseq
        %v285 = vshrl.u32 %v284, 7
        %v286 = vsub.s32 6, %v285
        %v287 = vrot.slane %v242, %v286
        %v288 = vmul.f32 %v252, %v287
        %v289 = vmul.f32 %v253, %v287
        %v290 = vlaneseq
        %v291 = vshrl.u32 %v290, 7
        %v292 = vsub.s32 0, %v291
        %v293 = vrot.slane %v243, %v292
        %v294 = vmul.f32 %v258, %v293
        %v295 = vmul.f32 %v259, %v293
        %v296 = vld [vmem:[%s209] sm:$0xff]
        %v297 = vld [vmem:[%s209 + $0x8] sm:$0xff]
        %v298 = vrot.slane %v296, 7
        %v299 = vrot.slane %v297, 7
        %vm300 = vcmp.lt.s32.totalorder %v246, 1
        %v301 = vsel %vm300, %v298, %v299
        %v302 = vsel %vm300, %v299, %v298
        %v303 = vrot.slane %v296, 1
        %v304 = vrot.slane %v297, 1
        %vm305 = vcmp.lt.s32.totalorder %v246, 7
        %v306 = vsel %vm305, %v303, %v304
        %v307 = vsel %vm305, %v304, %v303
        %v308 = vmul.f32 %v302, %v264
        %v309 = vmul.f32 %v301, %v265
        %v310 = vlaneseq
        %v311 = vshrl.u32 %v310, 7
        %v312 = vsub.s32 1, %v311
        %v313 = vrot.slane %v242, %v312
        %v314 = vmul.f32 %v296, %v313
        %v315 = vmul.f32 %v297, %v313
        %v316 = vadd.f32 %v308, %v314
        %v317 = vadd.f32 %v309, %v315
        %v318 = vmul.f32 %v306, %v270
        %v319 = vmul.f32 %v307, %v271
        %v320 = vadd.f32 %v316, %v318
        %v321 = vadd.f32 %v317, %v319
        %s322 = scalar_lea.vmem %s209, 16 [#allocation2]
        %v323 = vld [vmem:[%s322] sm:$0xff]
        %v324 = vld [vmem:[%s322 + $0x8] sm:$0xff]
        %v325 = vrot.slane %v323, 7
        %v326 = vrot.slane %v324, 7
        %v327 = vsel %vm300, %v325, %v326
        %v328 = vsel %vm300, %v326, %v325
        %v329 = vrot.slane %v323, 1
        %v330 = vrot.slane %v324, 1
        %v331 = vsel %vm305, %v329, %v330
        %v332 = vsel %vm305, %v330, %v329
        %v333 = vmul.f32 %v328, %v276
        %v334 = vmul.f32 %v327, %v277
        %v335 = vlaneseq
        %v336 = vshrl.u32 %v335, 7
        %v337 = vsub.s32 4, %v336
        %v338 = vrot.slane %v242, %v337
        %v339 = vmul.f32 %v323, %v338
        %v340 = vmul.f32 %v324, %v338
        %v341 = vadd.f32 %v333, %v339
        %v342 = vadd.f32 %v334, %v340
        %v343 = vmul.f32 %v331, %v282
        %v344 = vmul.f32 %v332, %v283
        %v345 = vadd.f32 %v341, %v343
        %v346 = vadd.f32 %v342, %v344
        %v347 = vadd.f32 %v320, %v345
        %v348 = vadd.f32 %v321, %v346
        %s349 = scalar_lea.vmem %s209, 32 [#allocation2]
        %v350 = vld [vmem:[%s349] sm:$0xff]
        %v351 = vld [vmem:[%s349 + $0x8] sm:$0xff]
        %v352 = vrot.slane %v350, 7
        %v353 = vrot.slane %v351, 7
        %v354 = vsel %vm300, %v352, %v353
        %v355 = vsel %vm300, %v353, %v352
        %v356 = vrot.slane %v350, 1
        %v357 = vrot.slane %v351, 1
        %v358 = vsel %vm305, %v356, %v357
        %v359 = vsel %vm305, %v357, %v356
        %v360 = vmul.f32 %v355, %v288
        %v361 = vmul.f32 %v354, %v289
        %v362 = vlaneseq
        %v363 = vshrl.u32 %v362, 7
        %v364 = vsub.s32 7, %v363
        %v365 = vrot.slane %v242, %v364
        %v366 = vmul.f32 %v350, %v365
        %v367 = vmul.f32 %v351, %v365
        %v368 = vadd.f32 %v360, %v366
        %v369 = vadd.f32 %v361, %v367
        %v370 = vmul.f32 %v358, %v294
        %v371 = vmul.f32 %v359, %v295
        %v372 = vadd.f32 %v368, %v370
        %v373 = vadd.f32 %v369, %v371
        %v374 = vadd.f32 %v347, %v372
        %v375 = vadd.f32 %v348, %v373
        %v377 = vlaneseq
        %v378 = vshrl.u32 %v377, 7
        %v379 = vsub.s32 0, %v378
        %v380 = vrot.slane %v244, %v379
        %v382 = vadd.f32 %v374, %v380
        %v383 = vadd.f32 %v375, %v380
        %s384 = scalar_lea.vmem %s238, 16 [#allocation7]
        %vm385 = vcmask 261120
        %386 = vst.msk [vmem:[%s384] sm:$0xff] %vm385, %v382
        %387 = vst.msk [vmem:[%s384 + $0x8] sm:$0xff] %vm385, %v383
        %v388 = vld [vmem:[%s322] sm:$0xff]
        %v389 = vld [vmem:[%s322 + $0x8] sm:$0xff]
        %v390 = vrot.slane %v388, 7
        %v391 = vrot.slane %v389, 7
        %v392 = vsel %vm300, %v390, %v391
        %v393 = vsel %vm300, %v391, %v390
        %v394 = vrot.slane %v388, 1
        %v395 = vrot.slane %v389, 1
        %v396 = vsel %vm305, %v394, %v395
        %v397 = vsel %vm305, %v395, %v394
        %v398 = vmul.f32 %v393, %v264
        %v399 = vmul.f32 %v392, %v265
        %v400 = vmul.f32 %v388, %v313
        %v401 = vmul.f32 %v389, %v313
        %v402 = vadd.f32 %v398, %v400
        %v403 = vadd.f32 %v399, %v401
        %v404 = vmul.f32 %v396, %v270
        %v405 = vmul.f32 %v397, %v271
        %v406 = vadd.f32 %v402, %v404
        %v407 = vadd.f32 %v403, %v405
        %v408 = vld [vmem:[%s349] sm:$0xff]
        %v409 = vld [vmem:[%s349 + $0x8] sm:$0xff]
        %v410 = vrot.slane %v408, 7
        %v411 = vrot.slane %v409, 7
        %v412 = vsel %vm300, %v410, %v411
        %v413 = vsel %vm300, %v411, %v410
        %v414 = vrot.slane %v408, 1
        %v415 = vrot.slane %v409, 1
        %v416 = vsel %vm305, %v414, %v415
        %v417 = vsel %vm305, %v415, %v414
        %v418 = vmul.f32 %v413, %v276
        %v419 = vmul.f32 %v412, %v277
        %v420 = vmul.f32 %v408, %v338
        %v421 = vmul.f32 %v409, %v338
        %v422 = vadd.f32 %v418, %v420
        %v423 = vadd.f32 %v419, %v421
        %v424 = vmul.f32 %v416, %v282
        %v425 = vmul.f32 %v417, %v283
        %v426 = vadd.f32 %v422, %v424
        %v427 = vadd.f32 %v423, %v425
        %v428 = vadd.f32 %v406, %v426
        %v429 = vadd.f32 %v407, %v427
        %s430 = scalar_lea.vmem %s209, 48 [#allocation2]
        %v431 = vld [vmem:[%s430] sm:$0xff]
        %v432 = vld [vmem:[%s430 + $0x8] sm:$0xff]
        %v433 = vrot.slane %v431, 7
        %v434 = vrot.slane %v432, 7
        %v435 = vsel %vm300, %v433, %v434
        %v436 = vsel %vm300, %v434, %v433
        %v437 = vrot.slane %v431, 1
        %v438 = vrot.slane %v432, 1
        %v439 = vsel %vm305, %v437, %v438
        %v440 = vsel %vm305, %v438, %v437
        %v441 = vmul.f32 %v436, %v288
        %v442 = vmul.f32 %v435, %v289
        %v443 = vmul.f32 %v431, %v365
        %v444 = vmul.f32 %v432, %v365
        %v445 = vadd.f32 %v441, %v443
        %v446 = vadd.f32 %v442, %v444
        %v447 = vmul.f32 %v439, %v294
        %v448 = vmul.f32 %v440, %v295
        %v449 = vadd.f32 %v445, %v447
        %v450 = vadd.f32 %v446, %v448
        %v451 = vadd.f32 %v428, %v449
        %v452 = vadd.f32 %v429, %v450
        %v453 = vadd.f32 %v451, %v380
        %v454 = vadd.f32 %v452, %v380
        %s455 = scalar_lea.vmem %s238, 32 [#allocation7]
        %456 = vst.msk [vmem:[%s455] sm:$0xff] %vm385, %v453
        %457 = vst.msk [vmem:[%s455 + $0x8] sm:$0xff] %vm385, %v454
        %v458 = vld [vmem:[%s349] sm:$0xff]
        %v459 = vld [vmem:[%s349 + $0x8] sm:$0xff]
        %v460 = vrot.slane %v458, 7
        %v461 = vrot.slane %v459, 7
        %v462 = vsel %vm300, %v460, %v461
        %v463 = vsel %vm300, %v461, %v460
        %v464 = vrot.slane %v458, 1
        %v465 = vrot.slane %v459, 1
        %v466 = vsel %vm305, %v464, %v465
        %v467 = vsel %vm305, %v465, %v464
        %v468 = vmul.f32 %v463, %v264
        %v469 = vmul.f32 %v462, %v265
        %v470 = vmul.f32 %v458, %v313
        %v471 = vmul.f32 %v459, %v313
        %v472 = vadd.f32 %v468, %v470
        %v473 = vadd.f32 %v469, %v471
        %v474 = vmul.f32 %v466, %v270
        %v475 = vmul.f32 %v467, %v271
        %v476 = vadd.f32 %v472, %v474
        %v477 = vadd.f32 %v473, %v475
        %v478 = vld [vmem:[%s430] sm:$0xff]
        %v479 = vld [vmem:[%s430 + $0x8] sm:$0xff]
        %v480 = vrot.slane %v478, 7
        %v481 = vrot.slane %v479, 7
        %v482 = vsel %vm300, %v480, %v481
        %v483 = vsel %vm300, %v481, %v480
        %v484 = vrot.slane %v478, 1
        %v485 = vrot.slane %v479, 1
        %v486 = vsel %vm305, %v484, %v485
        %v487 = vsel %vm305, %v485, %v484
        %v488 = vmul.f32 %v483, %v276
        %v489 = vmul.f32 %v482, %v277
        %v490 = vmul.f32 %v478, %v338
        %v491 = vmul.f32 %v479, %v338
        %v492 = vadd.f32 %v488, %v490
        %v493 = vadd.f32 %v489, %v491
        %v494 = vmul.f32 %v486, %v282
        %v495 = vmul.f32 %v487, %v283
        %v496 = vadd.f32 %v492, %v494
        %v497 = vadd.f32 %v493, %v495
        %v498 = vadd.f32 %v476, %v496
        %v499 = vadd.f32 %v477, %v497
        %s500 = scalar_lea.vmem %s209, 64 [#allocation2]
        %v501 = vld [vmem:[%s500] sm:$0xff]
        %v502 = vld [vmem:[%s500 + $0x8] sm:$0xff]
        %v503 = vrot.slane %v501, 7
        %v504 = vrot.slane %v502, 7
        %v505 = vsel %vm300, %v503, %v504
        %v506 = vsel %vm300, %v504, %v503
        %v507 = vrot.slane %v501, 1
        %v508 = vrot.slane %v502, 1
        %v509 = vsel %vm305, %v507, %v508
        %v510 = vsel %vm305, %v508, %v507
        %v511 = vmul.f32 %v506, %v288
        %v512 = vmul.f32 %v505, %v289
        %v513 = vmul.f32 %v501, %v365
        %v514 = vmul.f32 %v502, %v365
        %v515 = vadd.f32 %v511, %v513
        %v516 = vadd.f32 %v512, %v514
        %v517 = vmul.f32 %v509, %v294
        %v518 = vmul.f32 %v510, %v295
        %v519 = vadd.f32 %v515, %v517
        %v520 = vadd.f32 %v516, %v518
        %v521 = vadd.f32 %v498, %v519
        %v522 = vadd.f32 %v499, %v520
        %v523 = vadd.f32 %v521, %v380
        %v524 = vadd.f32 %v522, %v380
        %s525 = scalar_lea.vmem %s238, 48 [#allocation7]
        %526 = vst.msk [vmem:[%s525] sm:$0xff] %vm385, %v523
        %527 = vst.msk [vmem:[%s525 + $0x8] sm:$0xff] %vm385, %v524
        %v528 = vld [vmem:[%s430] sm:$0xff]
        %v529 = vld [vmem:[%s430 + $0x8] sm:$0xff]
        %v530 = vrot.slane %v528, 7
        %v531 = vrot.slane %v529, 7
        %v532 = vsel %vm300, %v530, %v531
        %v533 = vsel %vm300, %v531, %v530
        %v534 = vrot.slane %v528, 1
        %v535 = vrot.slane %v529, 1
        %v536 = vsel %vm305, %v534, %v535
        %v537 = vsel %vm305, %v535, %v534
        %v538 = vmul.f32 %v533, %v264
        %v539 = vmul.f32 %v532, %v265
        %v540 = vmul.f32 %v528, %v313
        %v541 = vmul.f32 %v529, %v313
        %v542 = vadd.f32 %v538, %v540
        %v543 = vadd.f32 %v539, %v541
        %v544 = vmul.f32 %v536, %v270
        %v545 = vmul.f32 %v537, %v271
        %v546 = vadd.f32 %v542, %v544
        %v547 = vadd.f32 %v543, %v545
        %v548 = vld [vmem:[%s500] sm:$0xff]
        %v549 = vld [vmem:[%s500 + $0x8] sm:$0xff]
        %v550 = vrot.slane %v548, 7
        %v551 = vrot.slane %v549, 7
        %v552 = vsel %vm300, %v550, %v551
        %v553 = vsel %vm300, %v551, %v550
        %v554 = vrot.slane %v548, 1
        %v555 = vrot.slane %v549, 1
        %v556 = vsel %vm305, %v554, %v555
        %v557 = vsel %vm305, %v555, %v554
        %v558 = vmul.f32 %v553, %v276
        %v559 = vmul.f32 %v552, %v277
        %v560 = vmul.f32 %v548, %v338
        %v561 = vmul.f32 %v549, %v338
        %v562 = vadd.f32 %v558, %v560
        %v563 = vadd.f32 %v559, %v561
        %v564 = vmul.f32 %v556, %v282
        %v565 = vmul.f32 %v557, %v283
        %v566 = vadd.f32 %v562, %v564
        %v567 = vadd.f32 %v563, %v565
        %v568 = vadd.f32 %v546, %v566
        %v569 = vadd.f32 %v547, %v567
        %s570 = scalar_lea.vmem %s209, 80 [#allocation2]
        %v571 = vld [vmem:[%s570] sm:$0xff]
        %v572 = vld [vmem:[%s570 + $0x8] sm:$0xff]
        %v573 = vrot.slane %v571, 7
        %v574 = vrot.slane %v572, 7
        %v575 = vsel %vm300, %v573, %v574
        %v576 = vsel %vm300, %v574, %v573
        %v577 = vrot.slane %v571, 1
        %v578 = vrot.slane %v572, 1
        %v579 = vsel %vm305, %v577, %v578
        %v580 = vsel %vm305, %v578, %v577
        %v581 = vmul.f32 %v576, %v288
        %v582 = vmul.f32 %v575, %v289
        %v583 = vmul.f32 %v571, %v365
        %v584 = vmul.f32 %v572, %v365
        %v585 = vadd.f32 %v581, %v583
        %v586 = vadd.f32 %v582, %v584
        %v587 = vmul.f32 %v579, %v294
        %v588 = vmul.f32 %v580, %v295
        %v589 = vadd.f32 %v585, %v587
        %v590 = vadd.f32 %v586, %v588
        %v591 = vadd.f32 %v568, %v589
        %v592 = vadd.f32 %v569, %v590
        %v593 = vadd.f32 %v591, %v380
        %v594 = vadd.f32 %v592, %v380
        %s595 = scalar_lea.vmem %s238, 64 [#allocation7]
        %596 = vst.msk [vmem:[%s595] sm:$0xff] %vm385, %v593
        %597 = vst.msk [vmem:[%s595 + $0x8] sm:$0xff] %vm385, %v594
        %v598 = vld [vmem:[%s500] sm:$0xff]
        %v599 = vld [vmem:[%s500 + $0x8] sm:$0xff]
        %v600 = vrot.slane %v598, 7
        %v601 = vrot.slane %v599, 7
        %v602 = vsel %vm300, %v600, %v601
        %v603 = vsel %vm300, %v601, %v600
        %v604 = vrot.slane %v598, 1
        %v605 = vrot.slane %v599, 1
        %v606 = vsel %vm305, %v604, %v605
        %v607 = vsel %vm305, %v605, %v604
        %v608 = vmul.f32 %v603, %v264
        %v609 = vmul.f32 %v602, %v265
        %v610 = vmul.f32 %v598, %v313
        %v611 = vmul.f32 %v599, %v313
        %v612 = vadd.f32 %v608, %v610
        %v613 = vadd.f32 %v609, %v611
        %v614 = vmul.f32 %v606, %v270
        %v615 = vmul.f32 %v607, %v271
        %v616 = vadd.f32 %v612, %v614
        %v617 = vadd.f32 %v613, %v615
        %v618 = vld [vmem:[%s570] sm:$0xff]
        %v619 = vld [vmem:[%s570 + $0x8] sm:$0xff]
        %v620 = vrot.slane %v618, 7
        %v621 = vrot.slane %v619, 7
        %v622 = vsel %vm300, %v620, %v621
        %v623 = vsel %vm300, %v621, %v620
        %v624 = vrot.slane %v618, 1
        %v625 = vrot.slane %v619, 1
        %v626 = vsel %vm305, %v624, %v625
        %v627 = vsel %vm305, %v625, %v624
        %v628 = vmul.f32 %v623, %v276
        %v629 = vmul.f32 %v622, %v277
        %v630 = vmul.f32 %v618, %v338
        %v631 = vmul.f32 %v619, %v338
        %v632 = vadd.f32 %v628, %v630
        %v633 = vadd.f32 %v629, %v631
        %v634 = vmul.f32 %v626, %v282
        %v635 = vmul.f32 %v627, %v283
        %v636 = vadd.f32 %v632, %v634
        %v637 = vadd.f32 %v633, %v635
        %v638 = vadd.f32 %v616, %v636
        %v639 = vadd.f32 %v617, %v637
        %s640 = scalar_lea.vmem %s209, 96 [#allocation2]
        %v641 = vld [vmem:[%s640] sm:$0xff]
        %v642 = vld [vmem:[%s640 + $0x8] sm:$0xff]
        %v643 = vrot.slane %v641, 7
        %v644 = vrot.slane %v642, 7
        %v645 = vsel %vm300, %v643, %v644
        %v646 = vsel %vm300, %v644, %v643
        %v647 = vrot.slane %v641, 1
        %v648 = vrot.slane %v642, 1
        %v649 = vsel %vm305, %v647, %v648
        %v650 = vsel %vm305, %v648, %v647
        %v651 = vmul.f32 %v646, %v288
        %v652 = vmul.f32 %v645, %v289
        %v653 = vmul.f32 %v641, %v365
        %v654 = vmul.f32 %v642, %v365
        %v655 = vadd.f32 %v651, %v653
        %v656 = vadd.f32 %v652, %v654
        %v657 = vmul.f32 %v649, %v294
        %v658 = vmul.f32 %v650, %v295
        %v659 = vadd.f32 %v655, %v657
        %v660 = vadd.f32 %v656, %v658
        %v661 = vadd.f32 %v638, %v659
        %v662 = vadd.f32 %v639, %v660
        %v663 = vadd.f32 %v661, %v380
        %v664 = vadd.f32 %v662, %v380
        %s665 = scalar_lea.vmem %s238, 80 [#allocation7]
        %666 = vst.msk [vmem:[%s665] sm:$0xff] %vm385, %v663
        %667 = vst.msk [vmem:[%s665 + $0x8] sm:$0xff] %vm385, %v664
        %v668 = vld [vmem:[%s570] sm:$0xff]
        %v669 = vld [vmem:[%s570 + $0x8] sm:$0xff]
        %v670 = vrot.slane %v668, 7
        %v671 = vrot.slane %v669, 7
        %v672 = vsel %vm300, %v670, %v671
        %v673 = vsel %vm300, %v671, %v670
        %v674 = vrot.slane %v668, 1
        %v675 = vrot.slane %v669, 1
        %v676 = vsel %vm305, %v674, %v675
        %v677 = vsel %vm305, %v675, %v674
        %v678 = vmul.f32 %v673, %v264
        %v679 = vmul.f32 %v672, %v265
        %v680 = vmul.f32 %v668, %v313
        %v681 = vmul.f32 %v669, %v313
        %v682 = vadd.f32 %v678, %v680
        %v683 = vadd.f32 %v679, %v681
        %v684 = vmul.f32 %v676, %v270
        %v685 = vmul.f32 %v677, %v271
        %v686 = vadd.f32 %v682, %v684
        %v687 = vadd.f32 %v683, %v685
        %v688 = vld [vmem:[%s640] sm:$0xff]
        %v689 = vld [vmem:[%s640 + $0x8] sm:$0xff]
        %v690 = vrot.slane %v688, 7
        %v691 = vrot.slane %v689, 7
        %v692 = vsel %vm300, %v690, %v691
        %v693 = vsel %vm300, %v691, %v690
        %v694 = vrot.slane %v688, 1
        %v695 = vrot.slane %v689, 1
        %v696 = vsel %vm305, %v694, %v695
        %v697 = vsel %vm305, %v695, %v694
        %v698 = vmul.f32 %v693, %v276
        %v699 = vmul.f32 %v692, %v277
        %v700 = vmul.f32 %v688, %v338
        %v701 = vmul.f32 %v689, %v338
        %v702 = vadd.f32 %v698, %v700
        %v703 = vadd.f32 %v699, %v701
        %v704 = vmul.f32 %v696, %v282
        %v705 = vmul.f32 %v697, %v283
        %v706 = vadd.f32 %v702, %v704
        %v707 = vadd.f32 %v703, %v705
        %v708 = vadd.f32 %v686, %v706
        %v709 = vadd.f32 %v687, %v707
        %s710 = scalar_lea.vmem %s209, 112 [#allocation2]
        %v711 = vld [vmem:[%s710] sm:$0xff]
        %v712 = vld [vmem:[%s710 + $0x8] sm:$0xff]
        %v713 = vrot.slane %v711, 7
        %v714 = vrot.slane %v712, 7
        %v715 = vsel %vm300, %v713, %v714
        %v716 = vsel %vm300, %v714, %v713
        %v717 = vrot.slane %v711, 1
        %v718 = vrot.slane %v712, 1
        %v719 = vsel %vm305, %v717, %v718
        %v720 = vsel %vm305, %v718, %v717
        %v721 = vmul.f32 %v716, %v288
        %v722 = vmul.f32 %v715, %v289
        %v723 = vmul.f32 %v711, %v365
        %v724 = vmul.f32 %v712, %v365
        %v725 = vadd.f32 %v721, %v723
        %v726 = vadd.f32 %v722, %v724
        %v727 = vmul.f32 %v719, %v294
        %v728 = vmul.f32 %v720, %v295
        %v729 = vadd.f32 %v725, %v727
        %v730 = vadd.f32 %v726, %v728
        %v731 = vadd.f32 %v708, %v729
        %v732 = vadd.f32 %v709, %v730
        %v733 = vadd.f32 %v731, %v380
        %v734 = vadd.f32 %v732, %v380
        %s735 = scalar_lea.vmem %s238, 96 [#allocation7]
        %736 = vst.msk [vmem:[%s735] sm:$0xff] %vm385, %v733
        %737 = vst.msk [vmem:[%s735 + $0x8] sm:$0xff] %vm385, %v734
        %v738 = vld [vmem:[%s640] sm:$0xff]
        %v739 = vld [vmem:[%s640 + $0x8] sm:$0xff]
        %v740 = vrot.slane %v738, 7
        %v741 = vrot.slane %v739, 7
        %v742 = vsel %vm300, %v740, %v741
        %v743 = vsel %vm300, %v741, %v740
        %v744 = vrot.slane %v738, 1
        %v745 = vrot.slane %v739, 1
        %v746 = vsel %vm305, %v744, %v745
        %v747 = vsel %vm305, %v745, %v744
        %v748 = vmul.f32 %v743, %v264
        %v749 = vmul.f32 %v742, %v265
        %v750 = vmul.f32 %v738, %v313
        %v751 = vmul.f32 %v739, %v313
        %v752 = vadd.f32 %v748, %v750
        %v753 = vadd.f32 %v749, %v751
        %v754 = vmul.f32 %v746, %v270
        %v755 = vmul.f32 %v747, %v271
        %v756 = vadd.f32 %v752, %v754
        %v757 = vadd.f32 %v753, %v755
        %v758 = vld [vmem:[%s710] sm:$0xff]
        %v759 = vld [vmem:[%s710 + $0x8] sm:$0xff]
        %v760 = vrot.slane %v758, 7
        %v761 = vrot.slane %v759, 7
        %v762 = vsel %vm300, %v760, %v761
        %v763 = vsel %vm300, %v761, %v760
        %v764 = vrot.slane %v758, 1
        %v765 = vrot.slane %v759, 1
        %v766 = vsel %vm305, %v764, %v765
        %v767 = vsel %vm305, %v765, %v764
        %v768 = vmul.f32 %v763, %v276
        %v769 = vmul.f32 %v762, %v277
        %v770 = vmul.f32 %v758, %v338
        %v771 = vmul.f32 %v759, %v338
        %v772 = vadd.f32 %v768, %v770
        %v773 = vadd.f32 %v769, %v771
        %v774 = vmul.f32 %v766, %v282
        %v775 = vmul.f32 %v767, %v283
        %v776 = vadd.f32 %v772, %v774
        %v777 = vadd.f32 %v773, %v775
        %v778 = vadd.f32 %v756, %v776
        %v779 = vadd.f32 %v757, %v777
        %s780 = scalar_lea.vmem %s209, 128 [#allocation2]
        %v781 = vld [vmem:[%s780] sm:$0xff]
        %v782 = vld [vmem:[%s780 + $0x8] sm:$0xff]
        %v783 = vrot.slane %v781, 7
        %v784 = vrot.slane %v782, 7
        %v785 = vsel %vm300, %v783, %v784
        %v786 = vsel %vm300, %v784, %v783
        %v787 = vrot.slane %v781, 1
        %v788 = vrot.slane %v782, 1
        %v789 = vsel %vm305, %v787, %v788
        %v790 = vsel %vm305, %v788, %v787
        %v791 = vmul.f32 %v786, %v288
        %v792 = vmul.f32 %v785, %v289
        %v793 = vmul.f32 %v781, %v365
        %v794 = vmul.f32 %v782, %v365
        %v795 = vadd.f32 %v791, %v793
        %v796 = vadd.f32 %v792, %v794
        %v797 = vmul.f32 %v789, %v294
        %v798 = vmul.f32 %v790, %v295
        %v799 = vadd.f32 %v795, %v797
        %v800 = vadd.f32 %v796, %v798
        %v801 = vadd.f32 %v778, %v799
        %v802 = vadd.f32 %v779, %v800
        %v803 = vadd.f32 %v801, %v380
        %v804 = vadd.f32 %v802, %v380
        %s805 = scalar_lea.vmem %s238, 112 [#allocation7]
        %806 = vst.msk [vmem:[%s805] sm:$0xff] %vm385, %v803
        %807 = vst.msk [vmem:[%s805 + $0x8] sm:$0xff] %vm385, %v804
        %v808 = vld [vmem:[%s710] sm:$0xff]
        %v809 = vld [vmem:[%s710 + $0x8] sm:$0xff]
        %v810 = vrot.slane %v808, 7
        %v811 = vrot.slane %v809, 7
        %v812 = vsel %vm300, %v810, %v811
        %v813 = vsel %vm300, %v811, %v810
        %v814 = vrot.slane %v808, 1
        %v815 = vrot.slane %v809, 1
        %v816 = vsel %vm305, %v814, %v815
        %v817 = vsel %vm305, %v815, %v814
        %v818 = vmul.f32 %v813, %v264
        %v819 = vmul.f32 %v812, %v265
        %v820 = vmul.f32 %v808, %v313
        %v821 = vmul.f32 %v809, %v313
        %v822 = vadd.f32 %v818, %v820
        %v823 = vadd.f32 %v819, %v821
        %v824 = vmul.f32 %v816, %v270
        %v825 = vmul.f32 %v817, %v271
        %v826 = vadd.f32 %v822, %v824
        %v827 = vadd.f32 %v823, %v825
        %v828 = vld [vmem:[%s780] sm:$0xff]
        %v829 = vld [vmem:[%s780 + $0x8] sm:$0xff]
        %v830 = vrot.slane %v828, 7
        %v831 = vrot.slane %v829, 7
        %v832 = vsel %vm300, %v830, %v831
        %v833 = vsel %vm300, %v831, %v830
        %v834 = vrot.slane %v828, 1
        %v835 = vrot.slane %v829, 1
        %v836 = vsel %vm305, %v834, %v835
        %v837 = vsel %vm305, %v835, %v834
        %v838 = vmul.f32 %v833, %v276
        %v839 = vmul.f32 %v832, %v277
        %v840 = vmul.f32 %v828, %v338
        %v841 = vmul.f32 %v829, %v338
        %v842 = vadd.f32 %v838, %v840
        %v843 = vadd.f32 %v839, %v841
        %v844 = vmul.f32 %v836, %v282
        %v845 = vmul.f32 %v837, %v283
        %v846 = vadd.f32 %v842, %v844
        %v847 = vadd.f32 %v843, %v845
        %v848 = vadd.f32 %v826, %v846
        %v849 = vadd.f32 %v827, %v847
        %s850 = scalar_lea.vmem %s209, 144 [#allocation2]
        %v851 = vld [vmem:[%s850] sm:$0xff]
        %v852 = vld [vmem:[%s850 + $0x8] sm:$0xff]
        %v853 = vrot.slane %v851, 7
        %v854 = vrot.slane %v852, 7
        %v855 = vsel %vm300, %v853, %v854
        %v856 = vsel %vm300, %v854, %v853
        %v857 = vrot.slane %v851, 1
        %v858 = vrot.slane %v852, 1
        %v859 = vsel %vm305, %v857, %v858
        %v860 = vsel %vm305, %v858, %v857
        %v861 = vmul.f32 %v856, %v288
        %v862 = vmul.f32 %v855, %v289
        %v863 = vmul.f32 %v851, %v365
        %v864 = vmul.f32 %v852, %v365
        %v865 = vadd.f32 %v861, %v863
        %v866 = vadd.f32 %v862, %v864
        %v867 = vmul.f32 %v859, %v294
        %v868 = vmul.f32 %v860, %v295
        %v869 = vadd.f32 %v865, %v867
        %v870 = vadd.f32 %v866, %v868
        %v871 = vadd.f32 %v848, %v869
        %v872 = vadd.f32 %v849, %v870
        %v873 = vadd.f32 %v871, %v380
        %v874 = vadd.f32 %v872, %v380
        %s875 = scalar_lea.vmem %s238, 128 [#allocation7]
        %876 = vst.msk [vmem:[%s875] sm:$0xff] %vm385, %v873
        %877 = vst.msk [vmem:[%s875 + $0x8] sm:$0xff] %vm385, %v874
        %v878 = vld [vmem:[%s780] sm:$0xff]
        %v879 = vld [vmem:[%s780 + $0x8] sm:$0xff]
        %v880 = vrot.slane %v878, 7
        %v881 = vrot.slane %v879, 7
        %v882 = vsel %vm300, %v880, %v881
        %v883 = vsel %vm300, %v881, %v880
        %v884 = vrot.slane %v878, 1
        %v885 = vrot.slane %v879, 1
        %v886 = vsel %vm305, %v884, %v885
        %v887 = vsel %vm305, %v885, %v884
        %v888 = vmul.f32 %v883, %v264
        %v889 = vmul.f32 %v882, %v265
        %v890 = vmul.f32 %v878, %v313
        %v891 = vmul.f32 %v879, %v313
        %v892 = vadd.f32 %v888, %v890
        %v893 = vadd.f32 %v889, %v891
        %v894 = vmul.f32 %v886, %v270
        %v895 = vmul.f32 %v887, %v271
        %v896 = vadd.f32 %v892, %v894
        %v897 = vadd.f32 %v893, %v895
        %v898 = vld [vmem:[%s850] sm:$0xff]
        %v899 = vld [vmem:[%s850 + $0x8] sm:$0xff]
        %v900 = vrot.slane %v898, 7
        %v901 = vrot.slane %v899, 7
        %v902 = vsel %vm300, %v900, %v901
        %v903 = vsel %vm300, %v901, %v900
        %v904 = vrot.slane %v898, 1
        %v905 = vrot.slane %v899, 1
        %v906 = vsel %vm305, %v904, %v905
        %v907 = vsel %vm305, %v905, %v904
        %v908 = vmul.f32 %v903, %v276
        %v909 = vmul.f32 %v902, %v277
        %v910 = vmul.f32 %v898, %v338
        %v911 = vmul.f32 %v899, %v338
        %v912 = vadd.f32 %v908, %v910
        %v913 = vadd.f32 %v909, %v911
        %v914 = vmul.f32 %v906, %v282
        %v915 = vmul.f32 %v907, %v283
        %v916 = vadd.f32 %v912, %v914
        %v917 = vadd.f32 %v913, %v915
        %v918 = vadd.f32 %v896, %v916
        %v919 = vadd.f32 %v897, %v917
        %s920 = scalar_lea.vmem %s209, 160 [#allocation2]
        %v921 = vld [vmem:[%s920] sm:$0xff]
        %v922 = vld [vmem:[%s920 + $0x8] sm:$0xff]
        %v923 = vrot.slane %v921, 7
        %v924 = vrot.slane %v922, 7
        %v925 = vsel %vm300, %v923, %v924
        %v926 = vsel %vm300, %v924, %v923
        %v927 = vrot.slane %v921, 1
        %v928 = vrot.slane %v922, 1
        %v929 = vsel %vm305, %v927, %v928
        %v930 = vsel %vm305, %v928, %v927
        %v931 = vmul.f32 %v926, %v288
        %v932 = vmul.f32 %v925, %v289
        %v933 = vmul.f32 %v921, %v365
        %v934 = vmul.f32 %v922, %v365
        %v935 = vadd.f32 %v931, %v933
        %v936 = vadd.f32 %v932, %v934
        %v937 = vmul.f32 %v929, %v294
        %v938 = vmul.f32 %v930, %v295
        %v939 = vadd.f32 %v935, %v937
        %v940 = vadd.f32 %v936, %v938
        %v941 = vadd.f32 %v918, %v939
        %v942 = vadd.f32 %v919, %v940
        %v943 = vadd.f32 %v941, %v380
        %v944 = vadd.f32 %v942, %v380
        %s945 = scalar_lea.vmem %s238, 144 [#allocation7]
        %946 = vst.msk [vmem:[%s945] sm:$0xff] %vm385, %v943
        %947 = vst.msk [vmem:[%s945 + $0x8] sm:$0xff] %vm385, %v944
        %v948 = vld [vmem:[%s850] sm:$0xff]
        %v949 = vld [vmem:[%s850 + $0x8] sm:$0xff]
        %v950 = vrot.slane %v948, 7
        %v951 = vrot.slane %v949, 7
        %v952 = vsel %vm300, %v950, %v951
        %v953 = vsel %vm300, %v951, %v950
        %v954 = vrot.slane %v948, 1
        %v955 = vrot.slane %v949, 1
        %v956 = vsel %vm305, %v954, %v955
        %v957 = vsel %vm305, %v955, %v954
        %v958 = vmul.f32 %v953, %v264
        %v959 = vmul.f32 %v952, %v265
        %v960 = vmul.f32 %v948, %v313
        %v961 = vmul.f32 %v949, %v313
        %v962 = vadd.f32 %v958, %v960
        %v963 = vadd.f32 %v959, %v961
        %v964 = vmul.f32 %v956, %v270
        %v965 = vmul.f32 %v957, %v271
        %v966 = vadd.f32 %v962, %v964
        %v967 = vadd.f32 %v963, %v965
        %v968 = vld [vmem:[%s920] sm:$0xff]
        %v969 = vld [vmem:[%s920 + $0x8] sm:$0xff]
        %v970 = vrot.slane %v968, 7
        %v971 = vrot.slane %v969, 7
        %v972 = vsel %vm300, %v970, %v971
        %v973 = vsel %vm300, %v971, %v970
        %v974 = vrot.slane %v968, 1
        %v975 = vrot.slane %v969, 1
        %v976 = vsel %vm305, %v974, %v975
        %v977 = vsel %vm305, %v975, %v974
        %v978 = vmul.f32 %v973, %v276
        %v979 = vmul.f32 %v972, %v277
        %v980 = vmul.f32 %v968, %v338
        %v981 = vmul.f32 %v969, %v338
        %v982 = vadd.f32 %v978, %v980
        %v983 = vadd.f32 %v979, %v981
        %v984 = vmul.f32 %v976, %v282
        %v985 = vmul.f32 %v977, %v283
        %v986 = vadd.f32 %v982, %v984
        %v987 = vadd.f32 %v983, %v985
        %v988 = vadd.f32 %v966, %v986
        %v989 = vadd.f32 %v967, %v987
        %s990 = scalar_lea.vmem %s209, 176 [#allocation2]
        %v991 = vld [vmem:[%s990] sm:$0xff]
        %v992 = vld [vmem:[%s990 + $0x8] sm:$0xff]
        %v993 = vrot.slane %v991, 7
        %v994 = vrot.slane %v992, 7
        %v995 = vsel %vm300, %v993, %v994
        %v996 = vsel %vm300, %v994, %v993
        %v997 = vrot.slane %v991, 1
        %v998 = vrot.slane %v992, 1
        %v999 = vsel %vm305, %v997, %v998
        %v1000 = vsel %vm305, %v998, %v997
        %v1001 = vmul.f32 %v996, %v288
        %v1002 = vmul.f32 %v995, %v289
        %v1003 = vmul.f32 %v991, %v365
        %v1004 = vmul.f32 %v992, %v365
        %v1005 = vadd.f32 %v1001, %v1003
        %v1006 = vadd.f32 %v1002, %v1004
        %v1007 = vmul.f32 %v999, %v294
        %v1008 = vmul.f32 %v1000, %v295
        %v1009 = vadd.f32 %v1005, %v1007
        %v1010 = vadd.f32 %v1006, %v1008
        %v1011 = vadd.f32 %v988, %v1009
        %v1012 = vadd.f32 %v989, %v1010
        %v1013 = vadd.f32 %v1011, %v380
        %v1014 = vadd.f32 %v1012, %v380
        %s1015 = scalar_lea.vmem %s238, 160 [#allocation7]
        %1016 = vst.msk [vmem:[%s1015] sm:$0xff] %vm385, %v1013
        %1017 = vst.msk [vmem:[%s1015 + $0x8] sm:$0xff] %vm385, %v1014
        %v1018 = vld [vmem:[%s920] sm:$0xff]
        %v1019 = vld [vmem:[%s920 + $0x8] sm:$0xff]
        %v1020 = vrot.slane %v1018, 7
        %v1021 = vrot.slane %v1019, 7
        %v1022 = vsel %vm300, %v1020, %v1021
        %v1023 = vsel %vm300, %v1021, %v1020
        %v1024 = vrot.slane %v1018, 1
        %v1025 = vrot.slane %v1019, 1
        %v1026 = vsel %vm305, %v1024, %v1025
        %v1027 = vsel %vm305, %v1025, %v1024
        %v1028 = vmul.f32 %v1023, %v264
        %v1029 = vmul.f32 %v1022, %v265
        %v1030 = vmul.f32 %v1018, %v313
        %v1031 = vmul.f32 %v1019, %v313
        %v1032 = vadd.f32 %v1028, %v1030
        %v1033 = vadd.f32 %v1029, %v1031
        %v1034 = vmul.f32 %v1026, %v270
        %v1035 = vmul.f32 %v1027, %v271
        %v1036 = vadd.f32 %v1032, %v1034
        %v1037 = vadd.f32 %v1033, %v1035
        %v1038 = vld [vmem:[%s990] sm:$0xff]
        %v1039 = vld [vmem:[%s990 + $0x8] sm:$0xff]
        %v1040 = vrot.slane %v1038, 7
        %v1041 = vrot.slane %v1039, 7
        %v1042 = vsel %vm300, %v1040, %v1041
        %v1043 = vsel %vm300, %v1041, %v1040
        %v1044 = vrot.slane %v1038, 1
        %v1045 = vrot.slane %v1039, 1
        %v1046 = vsel %vm305, %v1044, %v1045
        %v1047 = vsel %vm305, %v1045, %v1044
        %v1048 = vmul.f32 %v1043, %v276
        %v1049 = vmul.f32 %v1042, %v277
        %v1050 = vmul.f32 %v1038, %v338
        %v1051 = vmul.f32 %v1039, %v338
        %v1052 = vadd.f32 %v1048, %v1050
        %v1053 = vadd.f32 %v1049, %v1051
        %v1054 = vmul.f32 %v1046, %v282
        %v1055 = vmul.f32 %v1047, %v283
        %v1056 = vadd.f32 %v1052, %v1054
        %v1057 = vadd.f32 %v1053, %v1055
        %v1058 = vadd.f32 %v1036, %v1056
        %v1059 = vadd.f32 %v1037, %v1057
        %s1060 = scalar_lea.vmem %s209, 192 [#allocation2]
        %v1061 = vld [vmem:[%s1060] sm:$0xff]
        %v1062 = vld [vmem:[%s1060 + $0x8] sm:$0xff]
        %v1063 = vrot.slane %v1061, 7
        %v1064 = vrot.slane %v1062, 7
        %v1065 = vsel %vm300, %v1063, %v1064
        %v1066 = vsel %vm300, %v1064, %v1063
        %v1067 = vrot.slane %v1061, 1
        %v1068 = vrot.slane %v1062, 1
        %v1069 = vsel %vm305, %v1067, %v1068
        %v1070 = vsel %vm305, %v1068, %v1067
        %v1071 = vmul.f32 %v1066, %v288
        %v1072 = vmul.f32 %v1065, %v289
        %v1073 = vmul.f32 %v1061, %v365
        %v1074 = vmul.f32 %v1062, %v365
        %v1075 = vadd.f32 %v1071, %v1073
        %v1076 = vadd.f32 %v1072, %v1074
        %v1077 = vmul.f32 %v1069, %v294
        %v1078 = vmul.f32 %v1070, %v295
        %v1079 = vadd.f32 %v1075, %v1077
        %v1080 = vadd.f32 %v1076, %v1078
        %v1081 = vadd.f32 %v1058, %v1079
        %v1082 = vadd.f32 %v1059, %v1080
        %v1083 = vadd.f32 %v1081, %v380
        %v1084 = vadd.f32 %v1082, %v380
        %s1085 = scalar_lea.vmem %s238, 176 [#allocation7]
        %1086 = vst.msk [vmem:[%s1085] sm:$0xff] %vm385, %v1083
        %1087 = vst.msk [vmem:[%s1085 + $0x8] sm:$0xff] %vm385, %v1084
        %v1088 = vld [vmem:[%s990] sm:$0xff]
        %v1089 = vld [vmem:[%s990 + $0x8] sm:$0xff]
        %v1090 = vrot.slane %v1088, 7
        %v1091 = vrot.slane %v1089, 7
        %v1092 = vsel %vm300, %v1090, %v1091
        %v1093 = vsel %vm300, %v1091, %v1090
        %v1094 = vrot.slane %v1088, 1
        %v1095 = vrot.slane %v1089, 1
        %v1096 = vsel %vm305, %v1094, %v1095
        %v1097 = vsel %vm305, %v1095, %v1094
        %v1098 = vmul.f32 %v1093, %v264
        %v1099 = vmul.f32 %v1092, %v265
        %v1100 = vmul.f32 %v1088, %v313
        %v1101 = vmul.f32 %v1089, %v313
        %v1102 = vadd.f32 %v1098, %v1100
        %v1103 = vadd.f32 %v1099, %v1101
        %v1104 = vmul.f32 %v1096, %v270
        %v1105 = vmul.f32 %v1097, %v271
        %v1106 = vadd.f32 %v1102, %v1104
        %v1107 = vadd.f32 %v1103, %v1105
        %v1108 = vld [vmem:[%s1060] sm:$0xff]
        %v1109 = vld [vmem:[%s1060 + $0x8] sm:$0xff]
        %v1110 = vrot.slane %v1108, 7
        %v1111 = vrot.slane %v1109, 7
        %v1112 = vsel %vm300, %v1110, %v1111
        %v1113 = vsel %vm300, %v1111, %v1110
        %v1114 = vrot.slane %v1108, 1
        %v1115 = vrot.slane %v1109, 1
        %v1116 = vsel %vm305, %v1114, %v1115
        %v1117 = vsel %vm305, %v1115, %v1114
        %v1118 = vmul.f32 %v1113, %v276
        %v1119 = vmul.f32 %v1112, %v277
        %v1120 = vmul.f32 %v1108, %v338
        %v1121 = vmul.f32 %v1109, %v338
        %v1122 = vadd.f32 %v1118, %v1120
        %v1123 = vadd.f32 %v1119, %v1121
        %v1124 = vmul.f32 %v1116, %v282
        %v1125 = vmul.f32 %v1117, %v283
        %v1126 = vadd.f32 %v1122, %v1124
        %v1127 = vadd.f32 %v1123, %v1125
        %v1128 = vadd.f32 %v1106, %v1126
        %v1129 = vadd.f32 %v1107, %v1127
        %s1130 = scalar_lea.vmem %s209, 208 [#allocation2]
        %v1131 = vld [vmem:[%s1130] sm:$0xff]
        %v1132 = vld [vmem:[%s1130 + $0x8] sm:$0xff]
        %v1133 = vrot.slane %v1131, 7
        %v1134 = vrot.slane %v1132, 7
        %v1135 = vsel %vm300, %v1133, %v1134
        %v1136 = vsel %vm300, %v1134, %v1133
        %v1137 = vrot.slane %v1131, 1
        %v1138 = vrot.slane %v1132, 1
        %v1139 = vsel %vm305, %v1137, %v1138
        %v1140 = vsel %vm305, %v1138, %v1137
        %v1141 = vmul.f32 %v1136, %v288
        %v1142 = vmul.f32 %v1135, %v289
        %v1143 = vmul.f32 %v1131, %v365
        %v1144 = vmul.f32 %v1132, %v365
        %v1145 = vadd.f32 %v1141, %v1143
        %v1146 = vadd.f32 %v1142, %v1144
        %v1147 = vmul.f32 %v1139, %v294
        %v1148 = vmul.f32 %v1140, %v295
        %v1149 = vadd.f32 %v1145, %v1147
        %v1150 = vadd.f32 %v1146, %v1148
        %v1151 = vadd.f32 %v1128, %v1149
        %v1152 = vadd.f32 %v1129, %v1150
        %v1153 = vadd.f32 %v1151, %v380
        %v1154 = vadd.f32 %v1152, %v380
        %s1155 = scalar_lea.vmem %s238, 192 [#allocation7]
        %1156 = vst.msk [vmem:[%s1155] sm:$0xff] %vm385, %v1153
        %1157 = vst.msk [vmem:[%s1155 + $0x8] sm:$0xff] %vm385, %v1154
        %v1158 = vld [vmem:[%s1060] sm:$0xff]
        %v1159 = vld [vmem:[%s1060 + $0x8] sm:$0xff]
        %v1160 = vrot.slane %v1158, 7
        %v1161 = vrot.slane %v1159, 7
        %v1162 = vsel %vm300, %v1160, %v1161
        %v1163 = vsel %vm300, %v1161, %v1160
        %v1164 = vrot.slane %v1158, 1
        %v1165 = vrot.slane %v1159, 1
        %v1166 = vsel %vm305, %v1164, %v1165
        %v1167 = vsel %vm305, %v1165, %v1164
        %v1168 = vmul.f32 %v1163, %v264
        %v1169 = vmul.f32 %v1162, %v265
        %v1170 = vmul.f32 %v1158, %v313
        %v1171 = vmul.f32 %v1159, %v313
        %v1172 = vadd.f32 %v1168, %v1170
        %v1173 = vadd.f32 %v1169, %v1171
        %v1174 = vmul.f32 %v1166, %v270
        %v1175 = vmul.f32 %v1167, %v271
        %v1176 = vadd.f32 %v1172, %v1174
        %v1177 = vadd.f32 %v1173, %v1175
        %v1178 = vld [vmem:[%s1130] sm:$0xff]
        %v1179 = vld [vmem:[%s1130 + $0x8] sm:$0xff]
        %v1180 = vrot.slane %v1178, 7
        %v1181 = vrot.slane %v1179, 7
        %v1182 = vsel %vm300, %v1180, %v1181
        %v1183 = vsel %vm300, %v1181, %v1180
        %v1184 = vrot.slane %v1178, 1
        %v1185 = vrot.slane %v1179, 1
        %v1186 = vsel %vm305, %v1184, %v1185
        %v1187 = vsel %vm305, %v1185, %v1184
        %v1188 = vmul.f32 %v1183, %v276
        %v1189 = vmul.f32 %v1182, %v277
        %v1190 = vmul.f32 %v1178, %v338
        %v1191 = vmul.f32 %v1179, %v338
        %v1192 = vadd.f32 %v1188, %v1190
        %v1193 = vadd.f32 %v1189, %v1191
        %v1194 = vmul.f32 %v1186, %v282
        %v1195 = vmul.f32 %v1187, %v283
        %v1196 = vadd.f32 %v1192, %v1194
        %v1197 = vadd.f32 %v1193, %v1195
        %v1198 = vadd.f32 %v1176, %v1196
        %v1199 = vadd.f32 %v1177, %v1197
        %s1200 = scalar_lea.vmem %s209, 224 [#allocation2]
        %v1201 = vld [vmem:[%s1200] sm:$0xff]
        %v1202 = vld [vmem:[%s1200 + $0x8] sm:$0xff]
        %v1203 = vrot.slane %v1201, 7
        %v1204 = vrot.slane %v1202, 7
        %v1205 = vsel %vm300, %v1203, %v1204
        %v1206 = vsel %vm300, %v1204, %v1203
        %v1207 = vrot.slane %v1201, 1
        %v1208 = vrot.slane %v1202, 1
        %v1209 = vsel %vm305, %v1207, %v1208
        %v1210 = vsel %vm305, %v1208, %v1207
        %v1211 = vmul.f32 %v1206, %v288
        %v1212 = vmul.f32 %v1205, %v289
        %v1213 = vmul.f32 %v1201, %v365
        %v1214 = vmul.f32 %v1202, %v365
        %v1215 = vadd.f32 %v1211, %v1213
        %v1216 = vadd.f32 %v1212, %v1214
        %v1217 = vmul.f32 %v1209, %v294
        %v1218 = vmul.f32 %v1210, %v295
        %v1219 = vadd.f32 %v1215, %v1217
        %v1220 = vadd.f32 %v1216, %v1218
        %v1221 = vadd.f32 %v1198, %v1219
        %v1222 = vadd.f32 %v1199, %v1220
        %v1223 = vadd.f32 %v1221, %v380
        %v1224 = vadd.f32 %v1222, %v380
        %s1225 = scalar_lea.vmem %s238, 208 [#allocation7]
        %1226 = vst.msk [vmem:[%s1225] sm:$0xff] %vm385, %v1223
        %1227 = vst.msk [vmem:[%s1225 + $0x8] sm:$0xff] %vm385, %v1224
        %v1228 = vld [vmem:[%s1130] sm:$0xff]
        %v1229 = vld [vmem:[%s1130 + $0x8] sm:$0xff]
        %v1230 = vrot.slane %v1228, 7
        %v1231 = vrot.slane %v1229, 7
        %v1232 = vsel %vm300, %v1230, %v1231
        %v1233 = vsel %vm300, %v1231, %v1230
        %v1234 = vrot.slane %v1228, 1
        %v1235 = vrot.slane %v1229, 1
        %v1236 = vsel %vm305, %v1234, %v1235
        %v1237 = vsel %vm305, %v1235, %v1234
        %v1238 = vmul.f32 %v1233, %v264
        %v1239 = vmul.f32 %v1232, %v265
        %v1240 = vmul.f32 %v1228, %v313
        %v1241 = vmul.f32 %v1229, %v313
        %v1242 = vadd.f32 %v1238, %v1240
        %v1243 = vadd.f32 %v1239, %v1241
        %v1244 = vmul.f32 %v1236, %v270
        %v1245 = vmul.f32 %v1237, %v271
        %v1246 = vadd.f32 %v1242, %v1244
        %v1247 = vadd.f32 %v1243, %v1245
        %v1248 = vld [vmem:[%s1200] sm:$0xff]
        %v1249 = vld [vmem:[%s1200 + $0x8] sm:$0xff]
        %v1250 = vrot.slane %v1248, 7
        %v1251 = vrot.slane %v1249, 7
        %v1252 = vsel %vm300, %v1250, %v1251
        %v1253 = vsel %vm300, %v1251, %v1250
        %v1254 = vrot.slane %v1248, 1
        %v1255 = vrot.slane %v1249, 1
        %v1256 = vsel %vm305, %v1254, %v1255
        %v1257 = vsel %vm305, %v1255, %v1254
        %v1258 = vmul.f32 %v1253, %v276
        %v1259 = vmul.f32 %v1252, %v277
        %v1260 = vmul.f32 %v1248, %v338
        %v1261 = vmul.f32 %v1249, %v338
        %v1262 = vadd.f32 %v1258, %v1260
        %v1263 = vadd.f32 %v1259, %v1261
        %v1264 = vmul.f32 %v1256, %v282
        %v1265 = vmul.f32 %v1257, %v283
        %v1266 = vadd.f32 %v1262, %v1264
        %v1267 = vadd.f32 %v1263, %v1265
        %v1268 = vadd.f32 %v1246, %v1266
        %v1269 = vadd.f32 %v1247, %v1267
        %s1270 = scalar_lea.vmem %s209, 240 [#allocation2]
        %v1271 = vld [vmem:[%s1270] sm:$0xff]
        %v1272 = vld [vmem:[%s1270 + $0x8] sm:$0xff]
        %v1273 = vrot.slane %v1271, 7
        %v1274 = vrot.slane %v1272, 7
        %v1275 = vsel %vm300, %v1273, %v1274
        %v1276 = vsel %vm300, %v1274, %v1273
        %v1277 = vrot.slane %v1271, 1
        %v1278 = vrot.slane %v1272, 1
        %v1279 = vsel %vm305, %v1277, %v1278
        %v1280 = vsel %vm305, %v1278, %v1277
        %v1281 = vmul.f32 %v1276, %v288
        %v1282 = vmul.f32 %v1275, %v289
        %v1283 = vmul.f32 %v1271, %v365
        %v1284 = vmul.f32 %v1272, %v365
        %v1285 = vadd.f32 %v1281, %v1283
        %v1286 = vadd.f32 %v1282, %v1284
        %v1287 = vmul.f32 %v1279, %v294
        %v1288 = vmul.f32 %v1280, %v295
        %v1289 = vadd.f32 %v1285, %v1287
        %v1290 = vadd.f32 %v1286, %v1288
        %v1291 = vadd.f32 %v1268, %v1289
        %v1292 = vadd.f32 %v1269, %v1290
        %v1293 = vadd.f32 %v1291, %v380
        %v1294 = vadd.f32 %v1292, %v380
        %s1295 = scalar_lea.vmem %s238, 224 [#allocation7]
        %1296 = vst.msk [vmem:[%s1295] sm:$0xff] %vm385, %v1293
        %1297 = vst.msk [vmem:[%s1295 + $0x8] sm:$0xff] %vm385, %v1294
        %v1298 = vld [vmem:[%s209] sm:$0xff]
        %v1299 = vld [vmem:[%s209 + $0x8] sm:$0xff]
        %v1300 = vrot.slane %v1298, 7
        %v1301 = vrot.slane %v1299, 7
        %v1302 = vsel %vm300, %v1300, %v1301
        %v1303 = vsel %vm300, %v1301, %v1300
        %v1304 = vrot.slane %v1298, 1
        %v1305 = vrot.slane %v1299, 1
        %v1306 = vsel %vm305, %v1304, %v1305
        %v1307 = vsel %vm305, %v1305, %v1304
        %v1308 = vmul.f32 %v1303, %v276
        %v1309 = vmul.f32 %v1302, %v277
        %v1310 = vmul.f32 %v1298, %v338
        %v1311 = vmul.f32 %v1299, %v338
        %v1312 = vadd.f32 %v1308, %v1310
        %v1313 = vadd.f32 %v1309, %v1311
        %v1314 = vmul.f32 %v1306, %v282
        %v1315 = vmul.f32 %v1307, %v283
        %v1316 = vadd.f32 %v1312, %v1314
        %v1317 = vadd.f32 %v1313, %v1315
        %v1318 = vld [vmem:[%s322] sm:$0xff]
        %v1319 = vld [vmem:[%s322 + $0x8] sm:$0xff]
        %v1320 = vrot.slane %v1318, 7
        %v1321 = vrot.slane %v1319, 7
        %v1322 = vsel %vm300, %v1320, %v1321
        %v1323 = vsel %vm300, %v1321, %v1320
        %v1324 = vrot.slane %v1318, 1
        %v1325 = vrot.slane %v1319, 1
        %v1326 = vsel %vm305, %v1324, %v1325
        %v1327 = vsel %vm305, %v1325, %v1324
        %v1328 = vmul.f32 %v1323, %v288
        %v1329 = vmul.f32 %v1322, %v289
        %v1330 = vmul.f32 %v1318, %v365
        %v1331 = vmul.f32 %v1319, %v365
        %v1332 = vadd.f32 %v1328, %v1330
        %v1333 = vadd.f32 %v1329, %v1331
        %v1334 = vmul.f32 %v1326, %v294
        %v1335 = vmul.f32 %v1327, %v295
        %v1336 = vadd.f32 %v1332, %v1334
        %v1337 = vadd.f32 %v1333, %v1335
        %v1338 = vadd.f32 %v1316, %v1336
        %v1339 = vadd.f32 %v1317, %v1337
        %v1340 = vadd.f32 %v1338, %v380
        %v1341 = vadd.f32 %v1339, %v380
        %1342 = vst.msk [vmem:[%s238] sm:$0xff] %vm385, %v1340
        %1343 = vst.msk [vmem:[%s238 + $0x8] sm:$0xff] %vm385, %v1341
        %v1344 = vld [vmem:[%s1200] sm:$0xff]
        %v1345 = vld [vmem:[%s1200 + $0x8] sm:$0xff]
        %v1346 = vrot.slane %v1344, 7
        %v1347 = vrot.slane %v1345, 7
        %v1348 = vsel %vm300, %v1346, %v1347
        %v1349 = vsel %vm300, %v1347, %v1346
        %v1350 = vrot.slane %v1344, 1
        %v1351 = vrot.slane %v1345, 1
        %v1352 = vsel %vm305, %v1350, %v1351
        %v1353 = vsel %vm305, %v1351, %v1350
        %v1354 = vmul.f32 %v1349, %v264
        %v1355 = vmul.f32 %v1348, %v265
        %v1356 = vmul.f32 %v1344, %v313
        %v1357 = vmul.f32 %v1345, %v313
        %v1358 = vadd.f32 %v1354, %v1356
        %v1359 = vadd.f32 %v1355, %v1357
        %v1360 = vmul.f32 %v1352, %v270
        %v1361 = vmul.f32 %v1353, %v271
        %v1362 = vadd.f32 %v1358, %v1360
        %v1363 = vadd.f32 %v1359, %v1361
        %v1364 = vld [vmem:[%s1270] sm:$0xff]
        %v1365 = vld [vmem:[%s1270 + $0x8] sm:$0xff]
        %v1366 = vrot.slane %v1364, 7
        %v1367 = vrot.slane %v1365, 7
        %v1368 = vsel %vm300, %v1366, %v1367
        %v1369 = vsel %vm300, %v1367, %v1366
        %v1370 = vrot.slane %v1364, 1
        %v1371 = vrot.slane %v1365, 1
        %v1372 = vsel %vm305, %v1370, %v1371
        %v1373 = vsel %vm305, %v1371, %v1370
        %v1374 = vmul.f32 %v1369, %v276
        %v1375 = vmul.f32 %v1368, %v277
        %v1376 = vmul.f32 %v1364, %v338
        %v1377 = vmul.f32 %v1365, %v338
        %v1378 = vadd.f32 %v1374, %v1376
        %v1379 = vadd.f32 %v1375, %v1377
        %v1380 = vmul.f32 %v1372, %v282
        %v1381 = vmul.f32 %v1373, %v283
        %v1382 = vadd.f32 %v1378, %v1380
        %v1383 = vadd.f32 %v1379, %v1381
        %v1384 = vadd.f32 %v1362, %v1382
        %v1385 = vadd.f32 %v1363, %v1383
        %v1386 = vadd.f32 %v1384, %v380
        %v1387 = vadd.f32 %v1385, %v380
        %s1388 = scalar_lea.vmem %s238, 240 [#allocation7]
        %1389 = vst.msk [vmem:[%s1388] sm:$0xff] %vm385, %v1386
        %1390 = vst.msk [vmem:[%s1388 + $0x8] sm:$0xff] %vm385, %v1387
        %s1391 = sand.u32 %s123, 1
        %s1392 = scalar_lea.sflag [#allocation4], %s1391
        %s1393 = sand.u32 %s123, 1
        %s1394 = smul.addr %s1393, 256
        %s1395 = scalar_lea.vmem [#allocation7], %s1394
        // Predicated region
        $region41: #{tpu_custom_call.1} parent=31 // pred_check
          %p1396 = pneg %p133
        $region42: #{tpu_custom_call.1} parent=31 // pred_check_branch
          %1398 = sbr.rel (%p1396) target = $region44
        $region43: #{tpu_custom_call.1} parent=31 // pred_region
          %s1400 = ssub.s32 4096, 4096
          %1401 = vsyncadd %s1392, %s1400
          %s1402 = smul.addr %s25, 32
          %s1403 = sadd.s32 %s26, %s1402
          %s1404 = smul.addr %s1403, 128
          %s1405 = scalar_lea.hbm %s3, %s1404
          %s1406 = sshll.u32 %s1395, 4
          %s1407 = int_to_ptr.vmem [resolvable:$true] %s1406
          %1412 = dma.vmem_to_hbm [thread:$0]  %s1407, 4096, %s1405, %s1392, 128, 128, 8
        $region44: #{tpu_custom_call.1} parent=31 // pred_fallthru
          _
      $region32: #{tpu_custom_call.1} parent=5 // pred_fallthru
        _
      %p1413 = scmp.le.s32.totalorder 2, %s16
      // Predicated region
      $region45: #{tpu_custom_call.1} parent=5 // pred_check
        %p1414 = pneg %p1413
      $region46: #{tpu_custom_call.1} parent=5 // pred_check_branch
        %1416 = sbr.rel (%p1414) target = $region48
      $region47: #{tpu_custom_call.1} parent=5 // pred_region
        %s1417 = ssub.s32 %s16, 2
        // Predicated region
        $region49: #{tpu_custom_call.1} parent=47 // pred_check
          %p1418 = pneg %p139
        $region50: #{tpu_custom_call.1} parent=47 // pred_check_branch
          %1420 = sbr.rel (%p1418) target = $region52
        $region51: #{tpu_custom_call.1} parent=47 // pred_region
          %s1421 = sand.u32 %s124, 1
          %s1422 = scalar_lea.sflag [#allocation4], %s1421
          %s1423 = sand.u32 %s124, 1
          %s1424 = smul.addr %s1423, 256
          %s1425 = scalar_lea.vmem [#allocation7], %s1424
          %1426 = dma.done %s1422, 4096
        $region52: #{tpu_custom_call.1} parent=47 // pred_fallthru
          _
      $region48: #{tpu_custom_call.1} parent=5 // pred_fallthru
        _
    $region6: #{tpu_custom_call.1} parent=1 // loop_footer
      %s20 = sadd.s32 1, %s16
    $region7: #{tpu_custom_call.1} parent=1 // loop_footer_branch
      %15 = sbr.rel target = $region3
    $region8: #{tpu_custom_call.1} parent=1 // loop_exit
      _
    %1427 = vsyncpa [#allocation3], 1
    %s1428 = scalar_lea.sflag [#allocation3], 1
    %1429 = vsyncpa %s1428, 1
    %1430 = vsyncpa [#allocation6], 1
    %1431 = vsyncpa [#allocation4], 1
    %s1432 = scalar_lea.sflag [#allocation4], 1
    %1433 = vsyncpa %s1432, 1

</llo_original>
